<compile_context>
chip_gen: v7x
topology: tpu7x:2x2x1
jax: 0.10.0
libtpu: 0.0.40
codegen_flags: <defaults>
</compile_context>

<pallas_src>
import functools

import jax
import jax.numpy as jnp
from jax.experimental import pallas as pl
from jax.experimental.pallas import tpu as pltpu  # noqa: F401  (kept for parity)

PROJ_PAD = 128  # lane-dense padded width of the projection output


# ----------------------------------------------------------------------------
# Fused kernel
# ----------------------------------------------------------------------------
def fused_forward_kernel(xcat_ref, pos_ref, wemb_ref, wih_ref, whh_ref, b_ref,
                         wproj_ref, bproj_ref, out_ref,
                         *, L, B, e_layers, pred_len, d_model):
    f32 = jnp.float32
    bf16 = jnp.bfloat16
    D = d_model

    # ---------------- DataEmbedding: ONE matmul ------------------------------
    # xcat rows are [x[(t-1)%L], x[t], x[(t+1)%L], x_mark[t]] (circular Conv1d
    # unfold + time-feature input packed along the contraction axis); wemb is
    # the matching packed weight [conv tap -1; tap 0; tap +1; w_timeF].
    # TODO(synk): nn.Dropout is identity in eval mode; not modeled.
    emb = (jnp.dot(xcat_ref[...].astype(bf16), wemb_ref[...],
                   preferred_element_type=f32)
           + pos_ref[...])                                     # (L*B, D) f32

    # ---------------- layer 0 hoisted input transform ------------------------
    # Off the recurrent critical path: one (L*B, D) @ (D, 4D) matmul, bias
    # (b_ih + b_hh) folded in. Gate lanes are [i | f | g | o].
    pre0 = (jnp.dot(emb.astype(bf16), wih_ref[0], preferred_element_type=f32)
            + b_ref[0])                                        # (L*B, 4D)

    # ---------------- wavefronted stacked LSTM -------------------------------
    # Time loop outer, layers inner (both statically unrolled). Layer l >= 1
    # computes its input transform per step from h_{l-1,t}, so its recurrence
    # never waits for the full lower-layer sequence.
    h = [jnp.zeros((B, D), f32) for _ in range(e_layers)]
    c = [jnp.zeros((B, D), f32) for _ in range(e_layers)]
    last_h = []
    for t in range(L):
        r0 = t * B
        x_low = None
        for l in range(e_layers):
            if l == 0:
                gates = pre0[r0:r0 + B, :]                     # (B, 4D)
            else:
                gates = (jnp.dot(x_low.astype(bf16), wih_ref[l],
                                 preferred_element_type=f32) + b_ref[l])
            gates = gates + jnp.dot(h[l].astype(bf16), whh_ref[l],
                                    preferred_element_type=f32)
            # PyTorch gate order i, f, g, o (static lane slices of one vreg row).
            i_t = jax.nn.sigmoid(gates[:, 0 * D:1 * D])
            f_t = jax.nn.sigmoid(gates[:, 1 * D:2 * D])
            g_t = jnp.tanh(gates[:, 2 * D:3 * D])
            o_t = jax.nn.sigmoid(gates[:, 3 * D:4 * D])
            c[l] = f_t * c[l] + i_t * g_t
            h[l] = o_t * jnp.tanh(c[l])
            x_low = h[l]
        if t >= L - pred_len:                                  # only steps we project
            last_h.append(h[e_layers - 1])

    # ---------------- projection (last pred_len steps, lane-dense) -----------
    hs = jnp.concatenate(last_h, axis=0)                       # (pred_len*B, D)
    out_ref[...] = (jnp.dot(hs.astype(bf16), wproj_ref[...],
                            preferred_element_type=f32)
                    + bproj_ref[...]).astype(out_ref.dtype)


# ----------------------------------------------------------------------------
# Wrapper
# ----------------------------------------------------------------------------
def model_forward(params, x_enc, x_mark_enc, x_dec, x_mark_dec, *, pred_len, c_out):
    # x_dec / x_mark_dec are unused by the reference forward.
    del x_dec, x_mark_dec
    B, L, C = x_enc.shape
    D = params["w_ih"].shape[1]
    e_layers = params["w_ih"].shape[0]

    # Tiny boundary relayouts only (a few hundred floats): circular Conv1d
    # unfold + packing into a single embedding operand, time-major rows.
    x_tm = jnp.transpose(x_enc, (1, 0, 2))                     # (L, B, C)
    x_prev = jnp.roll(x_tm, 1, axis=0)                         # x[(t-1) mod L]
    x_next = jnp.roll(x_tm, -1, axis=0)                        # x[(t+1) mod L]
    xm_tm = jnp.transpose(x_mark_enc, (1, 0, 2))               # (L, B, mark)
    xcat = jnp.concatenate([x_prev, x_tm, x_next, xm_tm],
                           axis=-1).reshape(L * B, -1)         # (L*B, 3C+mark)
    pos = jnp.repeat(params["pos_emb"][:L], B, axis=0)         # (L*B, D)

    kernel = functools.partial(fused_forward_kernel, L=L, B=B,
                               e_layers=e_layers, pred_len=pred_len, d_model=D)
    # NOTE: working set < 0.1 MiB -> no grid / tiling needed; if batch is ever
    # scaled up, add a grid over batch with dimension_semantics=("parallel",).
    out = pl.pallas_call(
        kernel,
        out_shape=jax.ShapeDtypeStruct((pred_len * B, PROJ_PAD), jnp.float32),
    )(xcat, pos, params["w_emb"], params["w_ih"], params["w_hh"], params["b"],
      params["w_proj"], params["b_proj"])

    out = out[:, :c_out].reshape(pred_len, B, c_out)           # time-major rows
    return jnp.transpose(out, (1, 0, 2))                       # (B, pred_len, c_out)


# ----------------------------------------------------------------------------
# Deterministic parameter construction
# ----------------------------------------------------------------------------
def sinusoidal_pos_emb(L, D):
    position = jnp.arange(L, dtype=jnp.float32)[:, None]
    div_term = jnp.exp(jnp.arange(0, D, 2, dtype=jnp.float32)
                       * (-jnp.log(10000.0) / D))
    pe = jnp.zeros((L, D), jnp.float32)
    pe = pe.at[:, 0::2].set(jnp.sin(position * div_term))
    pe = pe.at[:, 1::2].set(jnp.cos(position * div_term))
    return pe


def init_params(key, *, enc_in, d_model, c_out, e_layers, mark_dim, seq_len):
    ks = jax.random.split(key, 4 + 4 * e_layers)
    scale = 0.1
    bf16 = jnp.bfloat16

    # TokenEmbedding Conv1d weight (kernel_tap, c_in, d_model) + timeF Linear,
    # packed along the contraction axis: rows = [tap t-1; tap t; tap t+1; w_tf].
    w_conv = scale * jax.random.normal(ks[0], (3, enc_in, d_model), jnp.float32)
    w_tf = scale * jax.random.normal(ks[1], (mark_dim, d_model), jnp.float32)
    w_emb = jnp.concatenate([w_conv[0], w_conv[1], w_conv[2], w_tf], axis=0)
    pos_emb = sinusoidal_pos_emb(seq_len, d_model)

    w_ih, w_hh, bias = [], [], []
    for l in range(e_layers):
        k0, k1, k2, k3 = ks[2 + 4 * l: 6 + 4 * l]
        # Gate-fused weights, lanes ordered [i | f | g | o], each d_model wide.
        w_ih.append(scale * jax.random.normal(k0, (d_model, 4 * d_model), jnp.float32))
        w_hh.append(scale * jax.random.normal(k1, (d_model, 4 * d_model), jnp.float32))
        b_ih = scale * jax.random.normal(k2, (1, 4 * d_model), jnp.float32)
        b_hh = scale * jax.random.normal(k3, (1, 4 * d_model), jnp.float32)
        bias.append(b_ih + b_hh)                    # exact fold of b_ih + b_hh
    w_ih = jnp.stack(w_ih)                          # (e_layers, D, 4D)
    w_hh = jnp.stack(w_hh)                          # (e_layers, D, 4D)
    bias = jnp.stack(bias)                          # (e_layers, 1, 4D)

    # Projection Linear padded to a lane-dense PROJ_PAD output; padding is zero.
    w_proj = jnp.zeros((d_model, PROJ_PAD), jnp.float32)
    w_proj = w_proj.at[:, :c_out].set(
        scale * jax.random.normal(ks[-2], (d_model, c_out), jnp.float32))
    b_proj = jnp.zeros((1, PROJ_PAD), jnp.float32)
    b_proj = b_proj.at[:, :c_out].set(
        scale * jax.random.normal(ks[-1], (1, c_out), jnp.float32))

    return {
        # MXU operands stored bf16 (f32 accumulation in-kernel); biases/pos f32.
        "w_emb": w_emb.astype(bf16), "pos_emb": pos_emb,
        "w_ih": w_ih.astype(bf16), "w_hh": w_hh.astype(bf16), "b": bias,
        "w_proj": w_proj.astype(bf16), "b_proj": b_proj,
    }


# ----------------------------------------------------------------------------
if __name__ == "__main__":
    B, L = 2, 8           # batch, sequence length
    enc_in = 4            # input channels
    d_model = 32          # hidden size
    e_layers = 2          # LSTM layers
    c_out = 4             # output channels
    pred_len = 4
    mark_dim = 4          # freq='h' -> 4 time features (timeF embedding)

    key = jax.random.PRNGKey(0)
    kx, km, kd, kmd, kp = jax.random.split(key, 5)
    x_enc = jax.random.normal(kx, (B, L, enc_in), jnp.float32)
    x_mark_enc = jax.random.normal(km, (B, L, mark_dim), jnp.float32)
    x_dec = jax.random.normal(kd, (B, L, enc_in), jnp.float32)          # unused
    x_mark_dec = jax.random.normal(kmd, (B, L, mark_dim), jnp.float32)  # unused

    params = init_params(kp, enc_in=enc_in, d_model=d_model, c_out=c_out,
                         e_layers=e_layers, mark_dim=mark_dim, seq_len=L)

    fwd = jax.jit(functools.partial(model_forward, pred_len=pred_len, c_out=c_out))
    out = fwd(params, x_enc, x_mark_enc, x_dec, x_mark_dec)
    out = jax.block_until_ready(out)
    assert out.shape == (B, pred_len, c_out), out.shape
    print("KERNEL_OK")
</pallas_src>

<mosaic_0001>
module attributes {stable_mosaic.version = 11 : i64} {
  func.func @fused_forward_kernel(%arg0: memref<16x16xf32, #tpu.memory_space<vmem>>, %arg1: memref<16x32xf32, #tpu.memory_space<vmem>>, %arg2: memref<16x32xbf16, #tpu.memory_space<vmem>>, %arg3: memref<2x32x128xbf16, #tpu.memory_space<vmem>>, %arg4: memref<2x32x128xbf16, #tpu.memory_space<vmem>>, %arg5: memref<2x1x128xf32, #tpu.memory_space<vmem>>, %arg6: memref<32x128xbf16, #tpu.memory_space<vmem>>, %arg7: memref<1x128xf32, #tpu.memory_space<vmem>>, %arg8: memref<8x128xf32, #tpu.memory_space<vmem>>) attributes {dimension_semantics = [], scalar_prefetch = 0 : i64, scratch_operands = 0 : i64, tpu.core_type = #tpu.core_type<tc>} {
    %c0 = arith.constant 0 : index
    %c0_0 = arith.constant 0 : index
    %0 = vector.load %arg0[%c0, %c0_0] : memref<16x16xf32, #tpu.memory_space<vmem>>, vector<16x16xf32>
    %1 = arith.truncf %0 : vector<16x16xf32> to vector<16x16xbf16>
    %c0_1 = arith.constant 0 : index
    %c0_2 = arith.constant 0 : index
    %2 = vector.load %arg2[%c0_1, %c0_2] : memref<16x32xbf16, #tpu.memory_space<vmem>>, vector<16x32xbf16>
    %cst = arith.constant dense<0.000000e+00> : vector<16x32xf32>
    %3 = tpu.matmul %1, %2, %cst {dimension_numbers = #tpu.dot_dimension_numbers<[1], [0], [0], [1], [0, 0, 1, 1], [], []>} : vector<16x16xbf16>, vector<16x32xbf16>, vector<16x32xf32> -> vector<16x32xf32>
    %c0_3 = arith.constant 0 : index
    %c0_4 = arith.constant 0 : index
    %4 = vector.load %arg1[%c0_3, %c0_4] : memref<16x32xf32, #tpu.memory_space<vmem>>, vector<16x32xf32>
    %5 = arith.addf %3, %4 : vector<16x32xf32>
    %6 = arith.truncf %5 : vector<16x32xf32> to vector<16x32xbf16>
    %c0_5 = arith.constant 0 : index
    %c0_6 = arith.constant 0 : index
    %c0_7 = arith.constant 0 : index
    %7 = vector.load %arg3[%c0_5, %c0_6, %c0_7] : memref<2x32x128xbf16, #tpu.memory_space<vmem>>, vector<1x32x128xbf16>
    %8 = vector.shape_cast %7 : vector<1x32x128xbf16> to vector<32x128xbf16>
    %cst_8 = arith.constant dense<0.000000e+00> : vector<16x128xf32>
    %9 = tpu.matmul %6, %8, %cst_8 {dimension_numbers = #tpu.dot_dimension_numbers<[1], [0], [0], [1], [0, 0, 1, 1], [], []>} : vector<16x32xbf16>, vector<32x128xbf16>, vector<16x128xf32> -> vector<16x128xf32>
    %c0_9 = arith.constant 0 : index
    %c0_10 = arith.constant 0 : index
    %c0_11 = arith.constant 0 : index
    %10 = vector.load %arg5[%c0_9, %c0_10, %c0_11] : memref<2x1x128xf32, #tpu.memory_space<vmem>>, vector<1x1x128xf32>
    %11 = vector.shape_cast %10 : vector<1x1x128xf32> to vector<1x128xf32>
    %12 = vector.broadcast %11 : vector<1x128xf32> to vector<16x128xf32>
    %13 = arith.addf %9, %12 : vector<16x128xf32>
    %cst_12 = arith.constant 0.000000e+00 : f32
    %14 = vector.broadcast %cst_12 : f32 to vector<2x32xf32>
    %cst_13 = arith.constant 0.000000e+00 : f32
    %15 = vector.broadcast %cst_13 : f32 to vector<2x32xf32>
    %cst_14 = arith.constant 0.000000e+00 : f32
    %16 = vector.broadcast %cst_14 : f32 to vector<2x32xf32>
    %cst_15 = arith.constant 0.000000e+00 : f32
    %17 = vector.broadcast %cst_15 : f32 to vector<2x32xf32>
    %18 = vector.extract_strided_slice %13 {offsets = [0, 0], sizes = [2, 128], strides = [1, 1]} : vector<16x128xf32> to vector<2x128xf32>
    %19 = arith.truncf %14 : vector<2x32xf32> to vector<2x32xbf16>
    %c0_16 = arith.constant 0 : index
    %c0_17 = arith.constant 0 : index
    %c0_18 = arith.constant 0 : index
    %20 = vector.load %arg4[%c0_16, %c0_17, %c0_18] : memref<2x32x128xbf16, #tpu.memory_space<vmem>>, vector<1x32x128xbf16>
    %21 = vector.shape_cast %20 : vector<1x32x128xbf16> to vector<32x128xbf16>
    %cst_19 = arith.constant dense<0.000000e+00> : vector<2x128xf32>
    %22 = tpu.matmul %19, %21, %cst_19 {dimension_numbers = #tpu.dot_dimension_numbers<[1], [0], [0], [1], [0, 0, 1, 1], [], []>} : vector<2x32xbf16>, vector<32x128xbf16>, vector<2x128xf32> -> vector<2x128xf32>
    %23 = arith.addf %18, %22 : vector<2x128xf32>
    %24 = vector.extract_strided_slice %23 {offsets = [0, 0], sizes = [2, 32], strides = [1, 1]} : vector<2x128xf32> to vector<2x32xf32>
    %25 = arith.negf %24 : vector<2x32xf32>
    %26 = math.exp %25 : vector<2x32xf32>
    %cst_20 = arith.constant 1.000000e+00 : f32
    %27 = vector.broadcast %cst_20 : f32 to vector<2x32xf32>
    %28 = arith.addf %27, %26 : vector<2x32xf32>
    %29 = arith.divf %27, %28 : vector<2x32xf32>
    %30 = vector.extract_strided_slice %23 {offsets = [0, 32], sizes = [2, 32], strides = [1, 1]} : vector<2x128xf32> to vector<2x32xf32>
    %31 = arith.negf %30 : vector<2x32xf32>
    %32 = math.exp %31 : vector<2x32xf32>
    %cst_21 = arith.constant 1.000000e+00 : f32
    %33 = vector.broadcast %cst_21 : f32 to vector<2x32xf32>
    %34 = arith.addf %33, %32 : vector<2x32xf32>
    %35 = arith.divf %33, %34 : vector<2x32xf32>
    %36 = vector.extract_strided_slice %23 {offsets = [0, 64], sizes = [2, 32], strides = [1, 1]} : vector<2x128xf32> to vector<2x32xf32>
    %37 = math.tanh %36 : vector<2x32xf32>
    %38 = vector.extract_strided_slice %23 {offsets = [0, 96], sizes = [2, 32], strides = [1, 1]} : vector<2x128xf32> to vector<2x32xf32>
    %39 = arith.negf %38 : vector<2x32xf32>
    %40 = math.exp %39 : vector<2x32xf32>
    %cst_22 = arith.constant 1.000000e+00 : f32
    %41 = vector.broadcast %cst_22 : f32 to vector<2x32xf32>
    %42 = arith.addf %41, %40 : vector<2x32xf32>
    %43 = arith.divf %41, %42 : vector<2x32xf32>
    %44 = arith.mulf %35, %16 : vector<2x32xf32>
    %45 = arith.mulf %29, %37 : vector<2x32xf32>
    %46 = arith.addf %44, %45 : vector<2x32xf32>
    %47 = math.tanh %46 : vector<2x32xf32>
    %48 = arith.mulf %43, %47 : vector<2x32xf32>
    %49 = arith.truncf %48 : vector<2x32xf32> to vector<2x32xbf16>
    %c1 = arith.constant 1 : index
    %c0_23 = arith.constant 0 : index
    %c0_24 = arith.constant 0 : index
    %50 = vector.load %arg3[%c1, %c0_23, %c0_24] : memref<2x32x128xbf16, #tpu.memory_space<vmem>>, vector<1x32x128xbf16>
    %51 = vector.shape_cast %50 : vector<1x32x128xbf16> to vector<32x128xbf16>
    %cst_25 = arith.constant dense<0.000000e+00> : vector<2x128xf32>
    %52 = tpu.matmul %49, %51, %cst_25 {dimension_numbers = #tpu.dot_dimension_numbers<[1], [0], [0], [1], [0, 0, 1, 1], [], []>} : vector<2x32xbf16>, vector<32x128xbf16>, vector<2x128xf32> -> vector<2x128xf32>
    %c1_26 = arith.constant 1 : index
    %c0_27 = arith.constant 0 : index
    %c0_28 = arith.constant 0 : index
    %53 = vector.load %arg5[%c1_26, %c0_27, %c0_28] : memref<2x1x128xf32, #tpu.memory_space<vmem>>, vector<1x1x128xf32>
    %54 = vector.shape_cast %53 : vector<1x1x128xf32> to vector<1x128xf32>
    %55 = vector.broadcast %54 : vector<1x128xf32> to vector<2x128xf32>
    %56 = arith.addf %52, %55 : vector<2x128xf32>
    %57 = arith.truncf %15 : vector<2x32xf32> to vector<2x32xbf16>
    %c1_29 = arith.constant 1 : index
    %c0_30 = arith.constant 0 : index
    %c0_31 = arith.constant 0 : index
    %58 = vector.load %arg4[%c1_29, %c0_30, %c0_31] : memref<2x32x128xbf16, #tpu.memory_space<vmem>>, vector<1x32x128xbf16>
    %59 = vector.shape_cast %58 : vector<1x32x128xbf16> to vector<32x128xbf16>
    %cst_32 = arith.constant dense<0.000000e+00> : vector<2x128xf32>
    %60 = tpu.matmul %57, %59, %cst_32 {dimension_numbers = #tpu.dot_dimension_numbers<[1], [0], [0], [1], [0, 0, 1, 1], [], []>} : vector<2x32xbf16>, vector<32x128xbf16>, vector<2x128xf32> -> vector<2x128xf32>
    %61 = arith.addf %56, %60 : vector<2x128xf32>
    %62 = vector.extract_strided_slice %61 {offsets = [0, 0], sizes = [2, 32], strides = [1, 1]} : vector<2x128xf32> to vector<2x32xf32>
    %63 = arith.negf %62 : vector<2x32xf32>
    %64 = math.exp %63 : vector<2x32xf32>
    %cst_33 = arith.constant 1.000000e+00 : f32
    %65 = vector.broadcast %cst_33 : f32 to vector<2x32xf32>
    %66 = arith.addf %65, %64 : vector<2x32xf32>
    %67 = arith.divf %65, %66 : vector<2x32xf32>
    %68 = vector.extract_strided_slice %61 {offsets = [0, 32], sizes = [2, 32], strides = [1, 1]} : vector<2x128xf32> to vector<2x32xf32>
    %69 = arith.negf %68 : vector<2x32xf32>
    %70 = math.exp %69 : vector<2x32xf32>
    %cst_34 = arith.constant 1.000000e+00 : f32
    %71 = vector.broadcast %cst_34 : f32 to vector<2x32xf32>
    %72 = arith.addf %71, %70 : vector<2x32xf32>
    %73 = arith.divf %71, %72 : vector<2x32xf32>
    %74 = vector.extract_strided_slice %61 {offsets = [0, 64], sizes = [2, 32], strides = [1, 1]} : vector<2x128xf32> to vector<2x32xf32>
    %75 = math.tanh %74 : vector<2x32xf32>
    %76 = vector.extract_strided_slice %61 {offsets = [0, 96], sizes = [2, 32], strides = [1, 1]} : vector<2x128xf32> to vector<2x32xf32>
    %77 = arith.negf %76 : vector<2x32xf32>
    %78 = math.exp %77 : vector<2x32xf32>
    %cst_35 = arith.constant 1.000000e+00 : f32
    %79 = vector.broadcast %cst_35 : f32 to vector<2x32xf32>
    %80 = arith.addf %79, %78 : vector<2x32xf32>
    %81 = arith.divf %79, %80 : vector<2x32xf32>
    %82 = arith.mulf %73, %17 : vector<2x32xf32>
    %83 = arith.mulf %67, %75 : vector<2x32xf32>
    %84 = arith.addf %82, %83 : vector<2x32xf32>
    %85 = math.tanh %84 : vector<2x32xf32>
    %86 = arith.mulf %81, %85 : vector<2x32xf32>
    %87 = vector.extract_strided_slice %13 {offsets = [2, 0], sizes = [2, 128], strides = [1, 1]} : vector<16x128xf32> to vector<2x128xf32>
    %88 = arith.truncf %48 : vector<2x32xf32> to vector<2x32xbf16>
    %c0_36 = arith.constant 0 : index
    %c0_37 = arith.constant 0 : index
    %c0_38 = arith.constant 0 : index
    %89 = vector.load %arg4[%c0_36, %c0_37, %c0_38] : memref<2x32x128xbf16, #tpu.memory_space<vmem>>, vector<1x32x128xbf16>
    %90 = vector.shape_cast %89 : vector<1x32x128xbf16> to vector<32x128xbf16>
    %cst_39 = arith.constant dense<0.000000e+00> : vector<2x128xf32>
    %91 = tpu.matmul %88, %90, %cst_39 {dimension_numbers = #tpu.dot_dimension_numbers<[1], [0], [0], [1], [0, 0, 1, 1], [], []>} : vector<2x32xbf16>, vector<32x128xbf16>, vector<2x128xf32> -> vector<2x128xf32>
    %92 = arith.addf %87, %91 : vector<2x128xf32>
    %93 = vector.extract_strided_slice %92 {offsets = [0, 0], sizes = [2, 32], strides = [1, 1]} : vector<2x128xf32> to vector<2x32xf32>
    %94 = arith.negf %93 : vector<2x32xf32>
    %95 = math.exp %94 : vector<2x32xf32>
    %cst_40 = arith.constant 1.000000e+00 : f32
    %96 = vector.broadcast %cst_40 : f32 to vector<2x32xf32>
    %97 = arith.addf %96, %95 : vector<2x32xf32>
    %98 = arith.divf %96, %97 : vector<2x32xf32>
    %99 = vector.extract_strided_slice %92 {offsets = [0, 32], sizes = [2, 32], strides = [1, 1]} : vector<2x128xf32> to vector<2x32xf32>
    %100 = arith.negf %99 : vector<2x32xf32>
    %101 = math.exp %100 : vector<2x32xf32>
    %cst_41 = arith.constant 1.000000e+00 : f32
    %102 = vector.broadcast %cst_41 : f32 to vector<2x32xf32>
    %103 = arith.addf %102, %101 : vector<2x32xf32>
    %104 = arith.divf %102, %103 : vector<2x32xf32>
    %105 = vector.extract_strided_slice %92 {offsets = [0, 64], sizes = [2, 32], strides = [1, 1]} : vector<2x128xf32> to vector<2x32xf32>
    %106 = math.tanh %105 : vector<2x32xf32>
    %107 = vector.extract_strided_slice %92 {offsets = [0, 96], sizes = [2, 32], strides = [1, 1]} : vector<2x128xf32> to vector<2x32xf32>
    %108 = arith.negf %107 : vector<2x32xf32>
    %109 = math.exp %108 : vector<2x32xf32>
    %cst_42 = arith.constant 1.000000e+00 : f32
    %110 = vector.broadcast %cst_42 : f32 to vector<2x32xf32>
    %111 = arith.addf %110, %109 : vector<2x32xf32>
    %112 = arith.divf %110, %111 : vector<2x32xf32>
    %113 = arith.mulf %104, %46 : vector<2x32xf32>
    %114 = arith.mulf %98, %106 : vector<2x32xf32>
    %115 = arith.addf %113, %114 : vector<2x32xf32>
    %116 = math.tanh %115 : vector<2x32xf32>
    %117 = arith.mulf %112, %116 : vector<2x32xf32>
    %118 = arith.truncf %117 : vector<2x32xf32> to vector<2x32xbf16>
    %c1_43 = arith.constant 1 : index
    %c0_44 = arith.constant 0 : index
    %c0_45 = arith.constant 0 : index
    %119 = vector.load %arg3[%c1_43, %c0_44, %c0_45] : memref<2x32x128xbf16, #tpu.memory_space<vmem>>, vector<1x32x128xbf16>
    %120 = vector.shape_cast %119 : vector<1x32x128xbf16> to vector<32x128xbf16>
    %cst_46 = arith.constant dense<0.000000e+00> : vector<2x128xf32>
    %121 = tpu.matmul %118, %120, %cst_46 {dimension_numbers = #tpu.dot_dimension_numbers<[1], [0], [0], [1], [0, 0, 1, 1], [], []>} : vector<2x32xbf16>, vector<32x128xbf16>, vector<2x128xf32> -> vector<2x128xf32>
    %c1_47 = arith.constant 1 : index
    %c0_48 = arith.constant 0 : index
    %c0_49 = arith.constant 0 : index
    %122 = vector.load %arg5[%c1_47, %c0_48, %c0_49] : memref<2x1x128xf32, #tpu.memory_space<vmem>>, vector<1x1x128xf32>
    %123 = vector.shape_cast %122 : vector<1x1x128xf32> to vector<1x128xf32>
    %124 = vector.broadcast %123 : vector<1x128xf32> to vector<2x128xf32>
    %125 = arith.addf %121, %124 : vector<2x128xf32>
    %126 = arith.truncf %86 : vector<2x32xf32> to vector<2x32xbf16>
    %c1_50 = arith.constant 1 : index
    %c0_51 = arith.constant 0 : index
    %c0_52 = arith.constant 0 : index
    %127 = vector.load %arg4[%c1_50, %c0_51, %c0_52] : memref<2x32x128xbf16, #tpu.memory_space<vmem>>, vector<1x32x128xbf16>
    %128 = vector.shape_cast %127 : vector<1x32x128xbf16> to vector<32x128xbf16>
    %cst_53 = arith.constant dense<0.000000e+00> : vector<2x128xf32>
    %129 = tpu.matmul %126, %128, %cst_53 {dimension_numbers = #tpu.dot_dimension_numbers<[1], [0], [0], [1], [0, 0, 1, 1], [], []>} : vector<2x32xbf16>, vector<32x128xbf16>, vector<2x128xf32> -> vector<2x128xf32>
    %130 = arith.addf %125, %129 : vector<2x128xf32>
    %131 = vector.extract_strided_slice %130 {offsets = [0, 0], sizes = [2, 32], strides = [1, 1]} : vector<2x128xf32> to vector<2x32xf32>
    %132 = arith.negf %131 : vector<2x32xf32>
    %133 = math.exp %132 : vector<2x32xf32>
    %cst_54 = arith.constant 1.000000e+00 : f32
    %134 = vector.broadcast %cst_54 : f32 to vector<2x32xf32>
    %135 = arith.addf %134, %133 : vector<2x32xf32>
    %136 = arith.divf %134, %135 : vector<2x32xf32>
    %137 = vector.extract_strided_slice %130 {offsets = [0, 32], sizes = [2, 32], strides = [1, 1]} : vector<2x128xf32> to vector<2x32xf32>
    %138 = arith.negf %137 : vector<2x32xf32>
    %139 = math.exp %138 : vector<2x32xf32>
    %cst_55 = arith.constant 1.000000e+00 : f32
    %140 = vector.broadcast %cst_55 : f32 to vector<2x32xf32>
    %141 = arith.addf %140, %139 : vector<2x32xf32>
    %142 = arith.divf %140, %141 : vector<2x32xf32>
    %143 = vector.extract_strided_slice %130 {offsets = [0, 64], sizes = [2, 32], strides = [1, 1]} : vector<2x128xf32> to vector<2x32xf32>
    %144 = math.tanh %143 : vector<2x32xf32>
    %145 = vector.extract_strided_slice %130 {offsets = [0, 96], sizes = [2, 32], strides = [1, 1]} : vector<2x128xf32> to vector<2x32xf32>
    %146 = arith.negf %145 : vector<2x32xf32>
    %147 = math.exp %146 : vector<2x32xf32>
    %cst_56 = arith.constant 1.000000e+00 : f32
    %148 = vector.broadcast %cst_56 : f32 to vector<2x32xf32>
    %149 = arith.addf %148, %147 : vector<2x32xf32>
    %150 = arith.divf %148, %149 : vector<2x32xf32>
    %151 = arith.mulf %142, %84 : vector<2x32xf32>
    %152 = arith.mulf %136, %144 : vector<2x32xf32>
    %153 = arith.addf %151, %152 : vector<2x32xf32>
    %154 = math.tanh %153 : vector<2x32xf32>
    %155 = arith.mulf %150, %154 : vector<2x32xf32>
    %156 = vector.extract_strided_slice %13 {offsets = [4, 0], sizes = [2, 128], strides = [1, 1]} : vector<16x128xf32> to vector<2x128xf32>
    %157 = arith.truncf %117 : vector<2x32xf32> to vector<2x32xbf16>
    %c0_57 = arith.constant 0 : index
    %c0_58 = arith.constant 0 : index
    %c0_59 = arith.constant 0 : index
    %158 = vector.load %arg4[%c0_57, %c0_58, %c0_59] : memref<2x32x128xbf16, #tpu.memory_space<vmem>>, vector<1x32x128xbf16>
    %159 = vector.shape_cast %158 : vector<1x32x128xbf16> to vector<32x128xbf16>
    %cst_60 = arith.constant dense<0.000000e+00> : vector<2x128xf32>
    %160 = tpu.matmul %157, %159, %cst_60 {dimension_numbers = #tpu.dot_dimension_numbers<[1], [0], [0], [1], [0, 0, 1, 1], [], []>} : vector<2x32xbf16>, vector<32x128xbf16>, vector<2x128xf32> -> vector<2x128xf32>
    %161 = arith.addf %156, %160 : vector<2x128xf32>
    %162 = vector.extract_strided_slice %161 {offsets = [0, 0], sizes = [2, 32], strides = [1, 1]} : vector<2x128xf32> to vector<2x32xf32>
    %163 = arith.negf %162 : vector<2x32xf32>
    %164 = math.exp %163 : vector<2x32xf32>
    %cst_61 = arith.constant 1.000000e+00 : f32
    %165 = vector.broadcast %cst_61 : f32 to vector<2x32xf32>
    %166 = arith.addf %165, %164 : vector<2x32xf32>
    %167 = arith.divf %165, %166 : vector<2x32xf32>
    %168 = vector.extract_strided_slice %161 {offsets = [0, 32], sizes = [2, 32], strides = [1, 1]} : vector<2x128xf32> to vector<2x32xf32>
    %169 = arith.negf %168 : vector<2x32xf32>
    %170 = math.exp %169 : vector<2x32xf32>
    %cst_62 = arith.constant 1.000000e+00 : f32
    %171 = vector.broadcast %cst_62 : f32 to vector<2x32xf32>
    %172 = arith.addf %171, %170 : vector<2x32xf32>
    %173 = arith.divf %171, %172 : vector<2x32xf32>
    %174 = vector.extract_strided_slice %161 {offsets = [0, 64], sizes = [2, 32], strides = [1, 1]} : vector<2x128xf32> to vector<2x32xf32>
    %175 = math.tanh %174 : vector<2x32xf32>
    %176 = vector.extract_strided_slice %161 {offsets = [0, 96], sizes = [2, 32], strides = [1, 1]} : vector<2x128xf32> to vector<2x32xf32>
    %177 = arith.negf %176 : vector<2x32xf32>
    %178 = math.exp %177 : vector<2x32xf32>
    %cst_63 = arith.constant 1.000000e+00 : f32
    %179 = vector.broadcast %cst_63 : f32 to vector<2x32xf32>
    %180 = arith.addf %179, %178 : vector<2x32xf32>
    %181 = arith.divf %179, %180 : vector<2x32xf32>
    %182 = arith.mulf %173, %115 : vector<2x32xf32>
    %183 = arith.mulf %167, %175 : vector<2x32xf32>
    %184 = arith.addf %182, %183 : vector<2x32xf32>
    %185 = math.tanh %184 : vector<2x32xf32>
    %186 = arith.mulf %181, %185 : vector<2x32xf32>
    %187 = arith.truncf %186 : vector<2x32xf32> to vector<2x32xbf16>
    %c1_64 = arith.constant 1 : index
    %c0_65 = arith.constant 0 : index
    %c0_66 = arith.constant 0 : index
    %188 = vector.load %arg3[%c1_64, %c0_65, %c0_66] : memref<2x32x128xbf16, #tpu.memory_space<vmem>>, vector<1x32x128xbf16>
    %189 = vector.shape_cast %188 : vector<1x32x128xbf16> to vector<32x128xbf16>
    %cst_67 = arith.constant dense<0.000000e+00> : vector<2x128xf32>
    %190 = tpu.matmul %187, %189, %cst_67 {dimension_numbers = #tpu.dot_dimension_numbers<[1], [0], [0], [1], [0, 0, 1, 1], [], []>} : vector<2x32xbf16>, vector<32x128xbf16>, vector<2x128xf32> -> vector<2x128xf32>
    %c1_68 = arith.constant 1 : index
    %c0_69 = arith.constant 0 : index
    %c0_70 = arith.constant 0 : index
    %191 = vector.load %arg5[%c1_68, %c0_69, %c0_70] : memref<2x1x128xf32, #tpu.memory_space<vmem>>, vector<1x1x128xf32>
    %192 = vector.shape_cast %191 : vector<1x1x128xf32> to vector<1x128xf32>
    %193 = vector.broadcast %192 : vector<1x128xf32> to vector<2x128xf32>
    %194 = arith.addf %190, %193 : vector<2x128xf32>
    %195 = arith.truncf %155 : vector<2x32xf32> to vector<2x32xbf16>
    %c1_71 = arith.constant 1 : index
    %c0_72 = arith.constant 0 : index
    %c0_73 = arith.constant 0 : index
    %196 = vector.load %arg4[%c1_71, %c0_72, %c0_73] : memref<2x32x128xbf16, #tpu.memory_space<vmem>>, vector<1x32x128xbf16>
    %197 = vector.shape_cast %196 : vector<1x32x128xbf16> to vector<32x128xbf16>
    %cst_74 = arith.constant dense<0.000000e+00> : vector<2x128xf32>
    %198 = tpu.matmul %195, %197, %cst_74 {dimension_numbers = #tpu.dot_dimension_numbers<[1], [0], [0], [1], [0, 0, 1, 1], [], []>} : vector<2x32xbf16>, vector<32x128xbf16>, vector<2x128xf32> -> vector<2x128xf32>
    %199 = arith.addf %194, %198 : vector<2x128xf32>
    %200 = vector.extract_strided_slice %199 {offsets = [0, 0], sizes = [2, 32], strides = [1, 1]} : vector<2x128xf32> to vector<2x32xf32>
    %201 = arith.negf %200 : vector<2x32xf32>
    %202 = math.exp %201 : vector<2x32xf32>
    %cst_75 = arith.constant 1.000000e+00 : f32
    %203 = vector.broadcast %cst_75 : f32 to vector<2x32xf32>
    %204 = arith.addf %203, %202 : vector<2x32xf32>
    %205 = arith.divf %203, %204 : vector<2x32xf32>
    %206 = vector.extract_strided_slice %199 {offsets = [0, 32], sizes = [2, 32], strides = [1, 1]} : vector<2x128xf32> to vector<2x32xf32>
    %207 = arith.negf %206 : vector<2x32xf32>
    %208 = math.exp %207 : vector<2x32xf32>
    %cst_76 = arith.constant 1.000000e+00 : f32
    %209 = vector.broadcast %cst_76 : f32 to vector<2x32xf32>
    %210 = arith.addf %209, %208 : vector<2x32xf32>
    %211 = arith.divf %209, %210 : vector<2x32xf32>
    %212 = vector.extract_strided_slice %199 {offsets = [0, 64], sizes = [2, 32], strides = [1, 1]} : vector<2x128xf32> to vector<2x32xf32>
    %213 = math.tanh %212 : vector<2x32xf32>
    %214 = vector.extract_strided_slice %199 {offsets = [0, 96], sizes = [2, 32], strides = [1, 1]} : vector<2x128xf32> to vector<2x32xf32>
    %215 = arith.negf %214 : vector<2x32xf32>
    %216 = math.exp %215 : vector<2x32xf32>
    %cst_77 = arith.constant 1.000000e+00 : f32
    %217 = vector.broadcast %cst_77 : f32 to vector<2x32xf32>
    %218 = arith.addf %217, %216 : vector<2x32xf32>
    %219 = arith.divf %217, %218 : vector<2x32xf32>
    %220 = arith.mulf %211, %153 : vector<2x32xf32>
    %221 = arith.mulf %205, %213 : vector<2x32xf32>
    %222 = arith.addf %220, %221 : vector<2x32xf32>
    %223 = math.tanh %222 : vector<2x32xf32>
    %224 = arith.mulf %219, %223 : vector<2x32xf32>
    %225 = vector.extract_strided_slice %13 {offsets = [6, 0], sizes = [2, 128], strides = [1, 1]} : vector<16x128xf32> to vector<2x128xf32>
    %226 = arith.truncf %186 : vector<2x32xf32> to vector<2x32xbf16>
    %c0_78 = arith.constant 0 : index
    %c0_79 = arith.constant 0 : index
    %c0_80 = arith.constant 0 : index
    %227 = vector.load %arg4[%c0_78, %c0_79, %c0_80] : memref<2x32x128xbf16, #tpu.memory_space<vmem>>, vector<1x32x128xbf16>
    %228 = vector.shape_cast %227 : vector<1x32x128xbf16> to vector<32x128xbf16>
    %cst_81 = arith.constant dense<0.000000e+00> : vector<2x128xf32>
    %229 = tpu.matmul %226, %228, %cst_81 {dimension_numbers = #tpu.dot_dimension_numbers<[1], [0], [0], [1], [0, 0, 1, 1], [], []>} : vector<2x32xbf16>, vector<32x128xbf16>, vector<2x128xf32> -> vector<2x128xf32>
    %230 = arith.addf %225, %229 : vector<2x128xf32>
    %231 = vector.extract_strided_slice %230 {offsets = [0, 0], sizes = [2, 32], strides = [1, 1]} : vector<2x128xf32> to vector<2x32xf32>
    %232 = arith.negf %231 : vector<2x32xf32>
    %233 = math.exp %232 : vector<2x32xf32>
    %cst_82 = arith.constant 1.000000e+00 : f32
    %234 = vector.broadcast %cst_82 : f32 to vector<2x32xf32>
    %235 = arith.addf %234, %233 : vector<2x32xf32>
    %236 = arith.divf %234, %235 : vector<2x32xf32>
    %237 = vector.extract_strided_slice %230 {offsets = [0, 32], sizes = [2, 32], strides = [1, 1]} : vector<2x128xf32> to vector<2x32xf32>
    %238 = arith.negf %237 : vector<2x32xf32>
    %239 = math.exp %238 : vector<2x32xf32>
    %cst_83 = arith.constant 1.000000e+00 : f32
    %240 = vector.broadcast %cst_83 : f32 to vector<2x32xf32>
    %241 = arith.addf %240, %239 : vector<2x32xf32>
    %242 = arith.divf %240, %241 : vector<2x32xf32>
    %243 = vector.extract_strided_slice %230 {offsets = [0, 64], sizes = [2, 32], strides = [1, 1]} : vector<2x128xf32> to vector<2x32xf32>
    %244 = math.tanh %243 : vector<2x32xf32>
    %245 = vector.extract_strided_slice %230 {offsets = [0, 96], sizes = [2, 32], strides = [1, 1]} : vector<2x128xf32> to vector<2x32xf32>
    %246 = arith.negf %245 : vector<2x32xf32>
    %247 = math.exp %246 : vector<2x32xf32>
    %cst_84 = arith.constant 1.000000e+00 : f32
    %248 = vector.broadcast %cst_84 : f32 to vector<2x32xf32>
    %249 = arith.addf %248, %247 : vector<2x32xf32>
    %250 = arith.divf %248, %249 : vector<2x32xf32>
    %251 = arith.mulf %242, %184 : vector<2x32xf32>
    %252 = arith.mulf %236, %244 : vector<2x32xf32>
    %253 = arith.addf %251, %252 : vector<2x32xf32>
    %254 = math.tanh %253 : vector<2x32xf32>
    %255 = arith.mulf %250, %254 : vector<2x32xf32>
    %256 = arith.truncf %255 : vector<2x32xf32> to vector<2x32xbf16>
    %c1_85 = arith.constant 1 : index
    %c0_86 = arith.constant 0 : index
    %c0_87 = arith.constant 0 : index
    %257 = vector.load %arg3[%c1_85, %c0_86, %c0_87] : memref<2x32x128xbf16, #tpu.memory_space<vmem>>, vector<1x32x128xbf16>
    %258 = vector.shape_cast %257 : vector<1x32x128xbf16> to vector<32x128xbf16>
    %cst_88 = arith.constant dense<0.000000e+00> : vector<2x128xf32>
    %259 = tpu.matmul %256, %258, %cst_88 {dimension_numbers = #tpu.dot_dimension_numbers<[1], [0], [0], [1], [0, 0, 1, 1], [], []>} : vector<2x32xbf16>, vector<32x128xbf16>, vector<2x128xf32> -> vector<2x128xf32>
    %c1_89 = arith.constant 1 : index
    %c0_90 = arith.constant 0 : index
    %c0_91 = arith.constant 0 : index
    %260 = vector.load %arg5[%c1_89, %c0_90, %c0_91] : memref<2x1x128xf32, #tpu.memory_space<vmem>>, vector<1x1x128xf32>
    %261 = vector.shape_cast %260 : vector<1x1x128xf32> to vector<1x128xf32>
    %262 = vector.broadcast %261 : vector<1x128xf32> to vector<2x128xf32>
    %263 = arith.addf %259, %262 : vector<2x128xf32>
    %264 = arith.truncf %224 : vector<2x32xf32> to vector<2x32xbf16>
    %c1_92 = arith.constant 1 : index
    %c0_93 = arith.constant 0 : index
    %c0_94 = arith.constant 0 : index
    %265 = vector.load %arg4[%c1_92, %c0_93, %c0_94] : memref<2x32x128xbf16, #tpu.memory_space<vmem>>, vector<1x32x128xbf16>
    %266 = vector.shape_cast %265 : vector<1x32x128xbf16> to vector<32x128xbf16>
    %cst_95 = arith.constant dense<0.000000e+00> : vector<2x128xf32>
    %267 = tpu.matmul %264, %266, %cst_95 {dimension_numbers = #tpu.dot_dimension_numbers<[1], [0], [0], [1], [0, 0, 1, 1], [], []>} : vector<2x32xbf16>, vector<32x128xbf16>, vector<2x128xf32> -> vector<2x128xf32>
    %268 = arith.addf %263, %267 : vector<2x128xf32>
    %269 = vector.extract_strided_slice %268 {offsets = [0, 0], sizes = [2, 32], strides = [1, 1]} : vector<2x128xf32> to vector<2x32xf32>
    %270 = arith.negf %269 : vector<2x32xf32>
    %271 = math.exp %270 : vector<2x32xf32>
    %cst_96 = arith.constant 1.000000e+00 : f32
    %272 = vector.broadcast %cst_96 : f32 to vector<2x32xf32>
    %273 = arith.addf %272, %271 : vector<2x32xf32>
    %274 = arith.divf %272, %273 : vector<2x32xf32>
    %275 = vector.extract_strided_slice %268 {offsets = [0, 32], sizes = [2, 32], strides = [1, 1]} : vector<2x128xf32> to vector<2x32xf32>
    %276 = arith.negf %275 : vector<2x32xf32>
    %277 = math.exp %276 : vector<2x32xf32>
    %cst_97 = arith.constant 1.000000e+00 : f32
    %278 = vector.broadcast %cst_97 : f32 to vector<2x32xf32>
    %279 = arith.addf %278, %277 : vector<2x32xf32>
    %280 = arith.divf %278, %279 : vector<2x32xf32>
    %281 = vector.extract_strided_slice %268 {offsets = [0, 64], sizes = [2, 32], strides = [1, 1]} : vector<2x128xf32> to vector<2x32xf32>
    %282 = math.tanh %281 : vector<2x32xf32>
    %283 = vector.extract_strided_slice %268 {offsets = [0, 96], sizes = [2, 32], strides = [1, 1]} : vector<2x128xf32> to vector<2x32xf32>
    %284 = arith.negf %283 : vector<2x32xf32>
    %285 = math.exp %284 : vector<2x32xf32>
    %cst_98 = arith.constant 1.000000e+00 : f32
    %286 = vector.broadcast %cst_98 : f32 to vector<2x32xf32>
    %287 = arith.addf %286, %285 : vector<2x32xf32>
    %288 = arith.divf %286, %287 : vector<2x32xf32>
    %289 = arith.mulf %280, %222 : vector<2x32xf32>
    %290 = arith.mulf %274, %282 : vector<2x32xf32>
    %291 = arith.addf %289, %290 : vector<2x32xf32>
    %292 = math.tanh %291 : vector<2x32xf32>
    %293 = arith.mulf %288, %292 : vector<2x32xf32>
    %294 = vector.extract_strided_slice %13 {offsets = [8, 0], sizes = [2, 128], strides = [1, 1]} : vector<16x128xf32> to vector<2x128xf32>
    %295 = arith.truncf %255 : vector<2x32xf32> to vector<2x32xbf16>
    %c0_99 = arith.constant 0 : index
    %c0_100 = arith.constant 0 : index
    %c0_101 = arith.constant 0 : index
    %296 = vector.load %arg4[%c0_99, %c0_100, %c0_101] : memref<2x32x128xbf16, #tpu.memory_space<vmem>>, vector<1x32x128xbf16>
    %297 = vector.shape_cast %296 : vector<1x32x128xbf16> to vector<32x128xbf16>
    %cst_102 = arith.constant dense<0.000000e+00> : vector<2x128xf32>
    %298 = tpu.matmul %295, %297, %cst_102 {dimension_numbers = #tpu.dot_dimension_numbers<[1], [0], [0], [1], [0, 0, 1, 1], [], []>} : vector<2x32xbf16>, vector<32x128xbf16>, vector<2x128xf32> -> vector<2x128xf32>
    %299 = arith.addf %294, %298 : vector<2x128xf32>
    %300 = vector.extract_strided_slice %299 {offsets = [0, 0], sizes = [2, 32], strides = [1, 1]} : vector<2x128xf32> to vector<2x32xf32>
    %301 = arith.negf %300 : vector<2x32xf32>
    %302 = math.exp %301 : vector<2x32xf32>
    %cst_103 = arith.constant 1.000000e+00 : f32
    %303 = vector.broadcast %cst_103 : f32 to vector<2x32xf32>
    %304 = arith.addf %303, %302 : vector<2x32xf32>
    %305 = arith.divf %303, %304 : vector<2x32xf32>
    %306 = vector.extract_strided_slice %299 {offsets = [0, 32], sizes = [2, 32], strides = [1, 1]} : vector<2x128xf32> to vector<2x32xf32>
    %307 = arith.negf %306 : vector<2x32xf32>
    %308 = math.exp %307 : vector<2x32xf32>
    %cst_104 = arith.constant 1.000000e+00 : f32
    %309 = vector.broadcast %cst_104 : f32 to vector<2x32xf32>
    %310 = arith.addf %309, %308 : vector<2x32xf32>
    %311 = arith.divf %309, %310 : vector<2x32xf32>
    %312 = vector.extract_strided_slice %299 {offsets = [0, 64], sizes = [2, 32], strides = [1, 1]} : vector<2x128xf32> to vector<2x32xf32>
    %313 = math.tanh %312 : vector<2x32xf32>
    %314 = vector.extract_strided_slice %299 {offsets = [0, 96], sizes = [2, 32], strides = [1, 1]} : vector<2x128xf32> to vector<2x32xf32>
    %315 = arith.negf %314 : vector<2x32xf32>
    %316 = math.exp %315 : vector<2x32xf32>
    %cst_105 = arith.constant 1.000000e+00 : f32
    %317 = vector.broadcast %cst_105 : f32 to vector<2x32xf32>
    %318 = arith.addf %317, %316 : vector<2x32xf32>
    %319 = arith.divf %317, %318 : vector<2x32xf32>
    %320 = arith.mulf %311, %253 : vector<2x32xf32>
    %321 = arith.mulf %305, %313 : vector<2x32xf32>
    %322 = arith.addf %320, %321 : vector<2x32xf32>
    %323 = math.tanh %322 : vector<2x32xf32>
    %324 = arith.mulf %319, %323 : vector<2x32xf32>
    %325 = arith.truncf %324 : vector<2x32xf32> to vector<2x32xbf16>
    %c1_106 = arith.constant 1 : index
    %c0_107 = arith.constant 0 : index
    %c0_108 = arith.constant 0 : index
    %326 = vector.load %arg3[%c1_106, %c0_107, %c0_108] : memref<2x32x128xbf16, #tpu.memory_space<vmem>>, vector<1x32x128xbf16>
    %327 = vector.shape_cast %326 : vector<1x32x128xbf16> to vector<32x128xbf16>
    %cst_109 = arith.constant dense<0.000000e+00> : vector<2x128xf32>
    %328 = tpu.matmul %325, %327, %cst_109 {dimension_numbers = #tpu.dot_dimension_numbers<[1], [0], [0], [1], [0, 0, 1, 1], [], []>} : vector<2x32xbf16>, vector<32x128xbf16>, vector<2x128xf32> -> vector<2x128xf32>
    %c1_110 = arith.constant 1 : index
    %c0_111 = arith.constant 0 : index
    %c0_112 = arith.constant 0 : index
    %329 = vector.load %arg5[%c1_110, %c0_111, %c0_112] : memref<2x1x128xf32, #tpu.memory_space<vmem>>, vector<1x1x128xf32>
    %330 = vector.shape_cast %329 : vector<1x1x128xf32> to vector<1x128xf32>
    %331 = vector.broadcast %330 : vector<1x128xf32> to vector<2x128xf32>
    %332 = arith.addf %328, %331 : vector<2x128xf32>
    %333 = arith.truncf %293 : vector<2x32xf32> to vector<2x32xbf16>
    %c1_113 = arith.constant 1 : index
    %c0_114 = arith.constant 0 : index
    %c0_115 = arith.constant 0 : index
    %334 = vector.load %arg4[%c1_113, %c0_114, %c0_115] : memref<2x32x128xbf16, #tpu.memory_space<vmem>>, vector<1x32x128xbf16>
    %335 = vector.shape_cast %334 : vector<1x32x128xbf16> to vector<32x128xbf16>
    %cst_116 = arith.constant dense<0.000000e+00> : vector<2x128xf32>
    %336 = tpu.matmul %333, %335, %cst_116 {dimension_numbers = #tpu.dot_dimension_numbers<[1], [0], [0], [1], [0, 0, 1, 1], [], []>} : vector<2x32xbf16>, vector<32x128xbf16>, vector<2x128xf32> -> vector<2x128xf32>
    %337 = arith.addf %332, %336 : vector<2x128xf32>
    %338 = vector.extract_strided_slice %337 {offsets = [0, 0], sizes = [2, 32], strides = [1, 1]} : vector<2x128xf32> to vector<2x32xf32>
    %339 = arith.negf %338 : vector<2x32xf32>
    %340 = math.exp %339 : vector<2x32xf32>
    %cst_117 = arith.constant 1.000000e+00 : f32
    %341 = vector.broadcast %cst_117 : f32 to vector<2x32xf32>
    %342 = arith.addf %341, %340 : vector<2x32xf32>
    %343 = arith.divf %341, %342 : vector<2x32xf32>
    %344 = vector.extract_strided_slice %337 {offsets = [0, 32], sizes = [2, 32], strides = [1, 1]} : vector<2x128xf32> to vector<2x32xf32>
    %345 = arith.negf %344 : vector<2x32xf32>
    %346 = math.exp %345 : vector<2x32xf32>
    %cst_118 = arith.constant 1.000000e+00 : f32
    %347 = vector.broadcast %cst_118 : f32 to vector<2x32xf32>
    %348 = arith.addf %347, %346 : vector<2x32xf32>
    %349 = arith.divf %347, %348 : vector<2x32xf32>
    %350 = vector.extract_strided_slice %337 {offsets = [0, 64], sizes = [2, 32], strides = [1, 1]} : vector<2x128xf32> to vector<2x32xf32>
    %351 = math.tanh %350 : vector<2x32xf32>
    %352 = vector.extract_strided_slice %337 {offsets = [0, 96], sizes = [2, 32], strides = [1, 1]} : vector<2x128xf32> to vector<2x32xf32>
    %353 = arith.negf %352 : vector<2x32xf32>
    %354 = math.exp %353 : vector<2x32xf32>
    %cst_119 = arith.constant 1.000000e+00 : f32
    %355 = vector.broadcast %cst_119 : f32 to vector<2x32xf32>
    %356 = arith.addf %355, %354 : vector<2x32xf32>
    %357 = arith.divf %355, %356 : vector<2x32xf32>
    %358 = arith.mulf %349, %291 : vector<2x32xf32>
    %359 = arith.mulf %343, %351 : vector<2x32xf32>
    %360 = arith.addf %358, %359 : vector<2x32xf32>
    %361 = math.tanh %360 : vector<2x32xf32>
    %362 = arith.mulf %357, %361 : vector<2x32xf32>
    %363 = vector.extract_strided_slice %13 {offsets = [10, 0], sizes = [2, 128], strides = [1, 1]} : vector<16x128xf32> to vector<2x128xf32>
    %364 = arith.truncf %324 : vector<2x32xf32> to vector<2x32xbf16>
    %c0_120 = arith.constant 0 : index
    %c0_121 = arith.constant 0 : index
    %c0_122 = arith.constant 0 : index
    %365 = vector.load %arg4[%c0_120, %c0_121, %c0_122] : memref<2x32x128xbf16, #tpu.memory_space<vmem>>, vector<1x32x128xbf16>
    %366 = vector.shape_cast %365 : vector<1x32x128xbf16> to vector<32x128xbf16>
    %cst_123 = arith.constant dense<0.000000e+00> : vector<2x128xf32>
    %367 = tpu.matmul %364, %366, %cst_123 {dimension_numbers = #tpu.dot_dimension_numbers<[1], [0], [0], [1], [0, 0, 1, 1], [], []>} : vector<2x32xbf16>, vector<32x128xbf16>, vector<2x128xf32> -> vector<2x128xf32>
    %368 = arith.addf %363, %367 : vector<2x128xf32>
    %369 = vector.extract_strided_slice %368 {offsets = [0, 0], sizes = [2, 32], strides = [1, 1]} : vector<2x128xf32> to vector<2x32xf32>
    %370 = arith.negf %369 : vector<2x32xf32>
    %371 = math.exp %370 : vector<2x32xf32>
    %cst_124 = arith.constant 1.000000e+00 : f32
    %372 = vector.broadcast %cst_124 : f32 to vector<2x32xf32>
    %373 = arith.addf %372, %371 : vector<2x32xf32>
    %374 = arith.divf %372, %373 : vector<2x32xf32>
    %375 = vector.extract_strided_slice %368 {offsets = [0, 32], sizes = [2, 32], strides = [1, 1]} : vector<2x128xf32> to vector<2x32xf32>
    %376 = arith.negf %375 : vector<2x32xf32>
    %377 = math.exp %376 : vector<2x32xf32>
    %cst_125 = arith.constant 1.000000e+00 : f32
    %378 = vector.broadcast %cst_125 : f32 to vector<2x32xf32>
    %379 = arith.addf %378, %377 : vector<2x32xf32>
    %380 = arith.divf %378, %379 : vector<2x32xf32>
    %381 = vector.extract_strided_slice %368 {offsets = [0, 64], sizes = [2, 32], strides = [1, 1]} : vector<2x128xf32> to vector<2x32xf32>
    %382 = math.tanh %381 : vector<2x32xf32>
    %383 = vector.extract_strided_slice %368 {offsets = [0, 96], sizes = [2, 32], strides = [1, 1]} : vector<2x128xf32> to vector<2x32xf32>
    %384 = arith.negf %383 : vector<2x32xf32>
    %385 = math.exp %384 : vector<2x32xf32>
    %cst_126 = arith.constant 1.000000e+00 : f32
    %386 = vector.broadcast %cst_126 : f32 to vector<2x32xf32>
    %387 = arith.addf %386, %385 : vector<2x32xf32>
    %388 = arith.divf %386, %387 : vector<2x32xf32>
    %389 = arith.mulf %380, %322 : vector<2x32xf32>
    %390 = arith.mulf %374, %382 : vector<2x32xf32>
    %391 = arith.addf %389, %390 : vector<2x32xf32>
    %392 = math.tanh %391 : vector<2x32xf32>
    %393 = arith.mulf %388, %392 : vector<2x32xf32>
    %394 = arith.truncf %393 : vector<2x32xf32> to vector<2x32xbf16>
    %c1_127 = arith.constant 1 : index
    %c0_128 = arith.constant 0 : index
    %c0_129 = arith.constant 0 : index
    %395 = vector.load %arg3[%c1_127, %c0_128, %c0_129] : memref<2x32x128xbf16, #tpu.memory_space<vmem>>, vector<1x32x128xbf16>
    %396 = vector.shape_cast %395 : vector<1x32x128xbf16> to vector<32x128xbf16>
    %cst_130 = arith.constant dense<0.000000e+00> : vector<2x128xf32>
    %397 = tpu.matmul %394, %396, %cst_130 {dimension_numbers = #tpu.dot_dimension_numbers<[1], [0], [0], [1], [0, 0, 1, 1], [], []>} : vector<2x32xbf16>, vector<32x128xbf16>, vector<2x128xf32> -> vector<2x128xf32>
    %c1_131 = arith.constant 1 : index
    %c0_132 = arith.constant 0 : index
    %c0_133 = arith.constant 0 : index
    %398 = vector.load %arg5[%c1_131, %c0_132, %c0_133] : memref<2x1x128xf32, #tpu.memory_space<vmem>>, vector<1x1x128xf32>
    %399 = vector.shape_cast %398 : vector<1x1x128xf32> to vector<1x128xf32>
    %400 = vector.broadcast %399 : vector<1x128xf32> to vector<2x128xf32>
    %401 = arith.addf %397, %400 : vector<2x128xf32>
    %402 = arith.truncf %362 : vector<2x32xf32> to vector<2x32xbf16>
    %c1_134 = arith.constant 1 : index
    %c0_135 = arith.constant 0 : index
    %c0_136 = arith.constant 0 : index
    %403 = vector.load %arg4[%c1_134, %c0_135, %c0_136] : memref<2x32x128xbf16, #tpu.memory_space<vmem>>, vector<1x32x128xbf16>
    %404 = vector.shape_cast %403 : vector<1x32x128xbf16> to vector<32x128xbf16>
    %cst_137 = arith.constant dense<0.000000e+00> : vector<2x128xf32>
    %405 = tpu.matmul %402, %404, %cst_137 {dimension_numbers = #tpu.dot_dimension_numbers<[1], [0], [0], [1], [0, 0, 1, 1], [], []>} : vector<2x32xbf16>, vector<32x128xbf16>, vector<2x128xf32> -> vector<2x128xf32>
    %406 = arith.addf %401, %405 : vector<2x128xf32>
    %407 = vector.extract_strided_slice %406 {offsets = [0, 0], sizes = [2, 32], strides = [1, 1]} : vector<2x128xf32> to vector<2x32xf32>
    %408 = arith.negf %407 : vector<2x32xf32>
    %409 = math.exp %408 : vector<2x32xf32>
    %cst_138 = arith.constant 1.000000e+00 : f32
    %410 = vector.broadcast %cst_138 : f32 to vector<2x32xf32>
    %411 = arith.addf %410, %409 : vector<2x32xf32>
    %412 = arith.divf %410, %411 : vector<2x32xf32>
    %413 = vector.extract_strided_slice %406 {offsets = [0, 32], sizes = [2, 32], strides = [1, 1]} : vector<2x128xf32> to vector<2x32xf32>
    %414 = arith.negf %413 : vector<2x32xf32>
    %415 = math.exp %414 : vector<2x32xf32>
    %cst_139 = arith.constant 1.000000e+00 : f32
    %416 = vector.broadcast %cst_139 : f32 to vector<2x32xf32>
    %417 = arith.addf %416, %415 : vector<2x32xf32>
    %418 = arith.divf %416, %417 : vector<2x32xf32>
    %419 = vector.extract_strided_slice %406 {offsets = [0, 64], sizes = [2, 32], strides = [1, 1]} : vector<2x128xf32> to vector<2x32xf32>
    %420 = math.tanh %419 : vector<2x32xf32>
    %421 = vector.extract_strided_slice %406 {offsets = [0, 96], sizes = [2, 32], strides = [1, 1]} : vector<2x128xf32> to vector<2x32xf32>
    %422 = arith.negf %421 : vector<2x32xf32>
    %423 = math.exp %422 : vector<2x32xf32>
    %cst_140 = arith.constant 1.000000e+00 : f32
    %424 = vector.broadcast %cst_140 : f32 to vector<2x32xf32>
    %425 = arith.addf %424, %423 : vector<2x32xf32>
    %426 = arith.divf %424, %425 : vector<2x32xf32>
    %427 = arith.mulf %418, %360 : vector<2x32xf32>
    %428 = arith.mulf %412, %420 : vector<2x32xf32>
    %429 = arith.addf %427, %428 : vector<2x32xf32>
    %430 = math.tanh %429 : vector<2x32xf32>
    %431 = arith.mulf %426, %430 : vector<2x32xf32>
    %432 = vector.extract_strided_slice %13 {offsets = [12, 0], sizes = [2, 128], strides = [1, 1]} : vector<16x128xf32> to vector<2x128xf32>
    %433 = arith.truncf %393 : vector<2x32xf32> to vector<2x32xbf16>
    %c0_141 = arith.constant 0 : index
    %c0_142 = arith.constant 0 : index
    %c0_143 = arith.constant 0 : index
    %434 = vector.load %arg4[%c0_141, %c0_142, %c0_143] : memref<2x32x128xbf16, #tpu.memory_space<vmem>>, vector<1x32x128xbf16>
    %435 = vector.shape_cast %434 : vector<1x32x128xbf16> to vector<32x128xbf16>
    %cst_144 = arith.constant dense<0.000000e+00> : vector<2x128xf32>
    %436 = tpu.matmul %433, %435, %cst_144 {dimension_numbers = #tpu.dot_dimension_numbers<[1], [0], [0], [1], [0, 0, 1, 1], [], []>} : vector<2x32xbf16>, vector<32x128xbf16>, vector<2x128xf32> -> vector<2x128xf32>
    %437 = arith.addf %432, %436 : vector<2x128xf32>
    %438 = vector.extract_strided_slice %437 {offsets = [0, 0], sizes = [2, 32], strides = [1, 1]} : vector<2x128xf32> to vector<2x32xf32>
    %439 = arith.negf %438 : vector<2x32xf32>
    %440 = math.exp %439 : vector<2x32xf32>
    %cst_145 = arith.constant 1.000000e+00 : f32
    %441 = vector.broadcast %cst_145 : f32 to vector<2x32xf32>
    %442 = arith.addf %441, %440 : vector<2x32xf32>
    %443 = arith.divf %441, %442 : vector<2x32xf32>
    %444 = vector.extract_strided_slice %437 {offsets = [0, 32], sizes = [2, 32], strides = [1, 1]} : vector<2x128xf32> to vector<2x32xf32>
    %445 = arith.negf %444 : vector<2x32xf32>
    %446 = math.exp %445 : vector<2x32xf32>
    %cst_146 = arith.constant 1.000000e+00 : f32
    %447 = vector.broadcast %cst_146 : f32 to vector<2x32xf32>
    %448 = arith.addf %447, %446 : vector<2x32xf32>
    %449 = arith.divf %447, %448 : vector<2x32xf32>
    %450 = vector.extract_strided_slice %437 {offsets = [0, 64], sizes = [2, 32], strides = [1, 1]} : vector<2x128xf32> to vector<2x32xf32>
    %451 = math.tanh %450 : vector<2x32xf32>
    %452 = vector.extract_strided_slice %437 {offsets = [0, 96], sizes = [2, 32], strides = [1, 1]} : vector<2x128xf32> to vector<2x32xf32>
    %453 = arith.negf %452 : vector<2x32xf32>
    %454 = math.exp %453 : vector<2x32xf32>
    %cst_147 = arith.constant 1.000000e+00 : f32
    %455 = vector.broadcast %cst_147 : f32 to vector<2x32xf32>
    %456 = arith.addf %455, %454 : vector<2x32xf32>
    %457 = arith.divf %455, %456 : vector<2x32xf32>
    %458 = arith.mulf %449, %391 : vector<2x32xf32>
    %459 = arith.mulf %443, %451 : vector<2x32xf32>
    %460 = arith.addf %458, %459 : vector<2x32xf32>
    %461 = math.tanh %460 : vector<2x32xf32>
    %462 = arith.mulf %457, %461 : vector<2x32xf32>
    %463 = arith.truncf %462 : vector<2x32xf32> to vector<2x32xbf16>
    %c1_148 = arith.constant 1 : index
    %c0_149 = arith.constant 0 : index
    %c0_150 = arith.constant 0 : index
    %464 = vector.load %arg3[%c1_148, %c0_149, %c0_150] : memref<2x32x128xbf16, #tpu.memory_space<vmem>>, vector<1x32x128xbf16>
    %465 = vector.shape_cast %464 : vector<1x32x128xbf16> to vector<32x128xbf16>
    %cst_151 = arith.constant dense<0.000000e+00> : vector<2x128xf32>
    %466 = tpu.matmul %463, %465, %cst_151 {dimension_numbers = #tpu.dot_dimension_numbers<[1], [0], [0], [1], [0, 0, 1, 1], [], []>} : vector<2x32xbf16>, vector<32x128xbf16>, vector<2x128xf32> -> vector<2x128xf32>
    %c1_152 = arith.constant 1 : index
    %c0_153 = arith.constant 0 : index
    %c0_154 = arith.constant 0 : index
    %467 = vector.load %arg5[%c1_152, %c0_153, %c0_154] : memref<2x1x128xf32, #tpu.memory_space<vmem>>, vector<1x1x128xf32>
    %468 = vector.shape_cast %467 : vector<1x1x128xf32> to vector<1x128xf32>
    %469 = vector.broadcast %468 : vector<1x128xf32> to vector<2x128xf32>
    %470 = arith.addf %466, %469 : vector<2x128xf32>
    %471 = arith.truncf %431 : vector<2x32xf32> to vector<2x32xbf16>
    %c1_155 = arith.constant 1 : index
    %c0_156 = arith.constant 0 : index
    %c0_157 = arith.constant 0 : index
    %472 = vector.load %arg4[%c1_155, %c0_156, %c0_157] : memref<2x32x128xbf16, #tpu.memory_space<vmem>>, vector<1x32x128xbf16>
    %473 = vector.shape_cast %472 : vector<1x32x128xbf16> to vector<32x128xbf16>
    %cst_158 = arith.constant dense<0.000000e+00> : vector<2x128xf32>
    %474 = tpu.matmul %471, %473, %cst_158 {dimension_numbers = #tpu.dot_dimension_numbers<[1], [0], [0], [1], [0, 0, 1, 1], [], []>} : vector<2x32xbf16>, vector<32x128xbf16>, vector<2x128xf32> -> vector<2x128xf32>
    %475 = arith.addf %470, %474 : vector<2x128xf32>
    %476 = vector.extract_strided_slice %475 {offsets = [0, 0], sizes = [2, 32], strides = [1, 1]} : vector<2x128xf32> to vector<2x32xf32>
    %477 = arith.negf %476 : vector<2x32xf32>
    %478 = math.exp %477 : vector<2x32xf32>
    %cst_159 = arith.constant 1.000000e+00 : f32
    %479 = vector.broadcast %cst_159 : f32 to vector<2x32xf32>
    %480 = arith.addf %479, %478 : vector<2x32xf32>
    %481 = arith.divf %479, %480 : vector<2x32xf32>
    %482 = vector.extract_strided_slice %475 {offsets = [0, 32], sizes = [2, 32], strides = [1, 1]} : vector<2x128xf32> to vector<2x32xf32>
    %483 = arith.negf %482 : vector<2x32xf32>
    %484 = math.exp %483 : vector<2x32xf32>
    %cst_160 = arith.constant 1.000000e+00 : f32
    %485 = vector.broadcast %cst_160 : f32 to vector<2x32xf32>
    %486 = arith.addf %485, %484 : vector<2x32xf32>
    %487 = arith.divf %485, %486 : vector<2x32xf32>
    %488 = vector.extract_strided_slice %475 {offsets = [0, 64], sizes = [2, 32], strides = [1, 1]} : vector<2x128xf32> to vector<2x32xf32>
    %489 = math.tanh %488 : vector<2x32xf32>
    %490 = vector.extract_strided_slice %475 {offsets = [0, 96], sizes = [2, 32], strides = [1, 1]} : vector<2x128xf32> to vector<2x32xf32>
    %491 = arith.negf %490 : vector<2x32xf32>
    %492 = math.exp %491 : vector<2x32xf32>
    %cst_161 = arith.constant 1.000000e+00 : f32
    %493 = vector.broadcast %cst_161 : f32 to vector<2x32xf32>
    %494 = arith.addf %493, %492 : vector<2x32xf32>
    %495 = arith.divf %493, %494 : vector<2x32xf32>
    %496 = arith.mulf %487, %429 : vector<2x32xf32>
    %497 = arith.mulf %481, %489 : vector<2x32xf32>
    %498 = arith.addf %496, %497 : vector<2x32xf32>
    %499 = math.tanh %498 : vector<2x32xf32>
    %500 = arith.mulf %495, %499 : vector<2x32xf32>
    %501 = vector.extract_strided_slice %13 {offsets = [14, 0], sizes = [2, 128], strides = [1, 1]} : vector<16x128xf32> to vector<2x128xf32>
    %502 = arith.truncf %462 : vector<2x32xf32> to vector<2x32xbf16>
    %c0_162 = arith.constant 0 : index
    %c0_163 = arith.constant 0 : index
    %c0_164 = arith.constant 0 : index
    %503 = vector.load %arg4[%c0_162, %c0_163, %c0_164] : memref<2x32x128xbf16, #tpu.memory_space<vmem>>, vector<1x32x128xbf16>
    %504 = vector.shape_cast %503 : vector<1x32x128xbf16> to vector<32x128xbf16>
    %cst_165 = arith.constant dense<0.000000e+00> : vector<2x128xf32>
    %505 = tpu.matmul %502, %504, %cst_165 {dimension_numbers = #tpu.dot_dimension_numbers<[1], [0], [0], [1], [0, 0, 1, 1], [], []>} : vector<2x32xbf16>, vector<32x128xbf16>, vector<2x128xf32> -> vector<2x128xf32>
    %506 = arith.addf %501, %505 : vector<2x128xf32>
    %507 = vector.extract_strided_slice %506 {offsets = [0, 0], sizes = [2, 32], strides = [1, 1]} : vector<2x128xf32> to vector<2x32xf32>
    %508 = arith.negf %507 : vector<2x32xf32>
    %509 = math.exp %508 : vector<2x32xf32>
    %cst_166 = arith.constant 1.000000e+00 : f32
    %510 = vector.broadcast %cst_166 : f32 to vector<2x32xf32>
    %511 = arith.addf %510, %509 : vector<2x32xf32>
    %512 = arith.divf %510, %511 : vector<2x32xf32>
    %513 = vector.extract_strided_slice %506 {offsets = [0, 32], sizes = [2, 32], strides = [1, 1]} : vector<2x128xf32> to vector<2x32xf32>
    %514 = arith.negf %513 : vector<2x32xf32>
    %515 = math.exp %514 : vector<2x32xf32>
    %cst_167 = arith.constant 1.000000e+00 : f32
    %516 = vector.broadcast %cst_167 : f32 to vector<2x32xf32>
    %517 = arith.addf %516, %515 : vector<2x32xf32>
    %518 = arith.divf %516, %517 : vector<2x32xf32>
    %519 = vector.extract_strided_slice %506 {offsets = [0, 64], sizes = [2, 32], strides = [1, 1]} : vector<2x128xf32> to vector<2x32xf32>
    %520 = math.tanh %519 : vector<2x32xf32>
    %521 = vector.extract_strided_slice %506 {offsets = [0, 96], sizes = [2, 32], strides = [1, 1]} : vector<2x128xf32> to vector<2x32xf32>
    %522 = arith.negf %521 : vector<2x32xf32>
    %523 = math.exp %522 : vector<2x32xf32>
    %cst_168 = arith.constant 1.000000e+00 : f32
    %524 = vector.broadcast %cst_168 : f32 to vector<2x32xf32>
    %525 = arith.addf %524, %523 : vector<2x32xf32>
    %526 = arith.divf %524, %525 : vector<2x32xf32>
    %527 = arith.mulf %518, %460 : vector<2x32xf32>
    %528 = arith.mulf %512, %520 : vector<2x32xf32>
    %529 = arith.addf %527, %528 : vector<2x32xf32>
    %530 = math.tanh %529 : vector<2x32xf32>
    %531 = arith.mulf %526, %530 : vector<2x32xf32>
    %532 = arith.truncf %531 : vector<2x32xf32> to vector<2x32xbf16>
    %c1_169 = arith.constant 1 : index
    %c0_170 = arith.constant 0 : index
    %c0_171 = arith.constant 0 : index
    %533 = vector.load %arg3[%c1_169, %c0_170, %c0_171] : memref<2x32x128xbf16, #tpu.memory_space<vmem>>, vector<1x32x128xbf16>
    %534 = vector.shape_cast %533 : vector<1x32x128xbf16> to vector<32x128xbf16>
    %cst_172 = arith.constant dense<0.000000e+00> : vector<2x128xf32>
    %535 = tpu.matmul %532, %534, %cst_172 {dimension_numbers = #tpu.dot_dimension_numbers<[1], [0], [0], [1], [0, 0, 1, 1], [], []>} : vector<2x32xbf16>, vector<32x128xbf16>, vector<2x128xf32> -> vector<2x128xf32>
    %c1_173 = arith.constant 1 : index
    %c0_174 = arith.constant 0 : index
    %c0_175 = arith.constant 0 : index
    %536 = vector.load %arg5[%c1_173, %c0_174, %c0_175] : memref<2x1x128xf32, #tpu.memory_space<vmem>>, vector<1x1x128xf32>
    %537 = vector.shape_cast %536 : vector<1x1x128xf32> to vector<1x128xf32>
    %538 = vector.broadcast %537 : vector<1x128xf32> to vector<2x128xf32>
    %539 = arith.addf %535, %538 : vector<2x128xf32>
    %540 = arith.truncf %500 : vector<2x32xf32> to vector<2x32xbf16>
    %c1_176 = arith.constant 1 : index
    %c0_177 = arith.constant 0 : index
    %c0_178 = arith.constant 0 : index
    %541 = vector.load %arg4[%c1_176, %c0_177, %c0_178] : memref<2x32x128xbf16, #tpu.memory_space<vmem>>, vector<1x32x128xbf16>
    %542 = vector.shape_cast %541 : vector<1x32x128xbf16> to vector<32x128xbf16>
    %cst_179 = arith.constant dense<0.000000e+00> : vector<2x128xf32>
    %543 = tpu.matmul %540, %542, %cst_179 {dimension_numbers = #tpu.dot_dimension_numbers<[1], [0], [0], [1], [0, 0, 1, 1], [], []>} : vector<2x32xbf16>, vector<32x128xbf16>, vector<2x128xf32> -> vector<2x128xf32>
    %544 = arith.addf %539, %543 : vector<2x128xf32>
    %545 = vector.extract_strided_slice %544 {offsets = [0, 0], sizes = [2, 32], strides = [1, 1]} : vector<2x128xf32> to vector<2x32xf32>
    %546 = arith.negf %545 : vector<2x32xf32>
    %547 = math.exp %546 : vector<2x32xf32>
    %cst_180 = arith.constant 1.000000e+00 : f32
    %548 = vector.broadcast %cst_180 : f32 to vector<2x32xf32>
    %549 = arith.addf %548, %547 : vector<2x32xf32>
    %550 = arith.divf %548, %549 : vector<2x32xf32>
    %551 = vector.extract_strided_slice %544 {offsets = [0, 32], sizes = [2, 32], strides = [1, 1]} : vector<2x128xf32> to vector<2x32xf32>
    %552 = arith.negf %551 : vector<2x32xf32>
    %553 = math.exp %552 : vector<2x32xf32>
    %cst_181 = arith.constant 1.000000e+00 : f32
    %554 = vector.broadcast %cst_181 : f32 to vector<2x32xf32>
    %555 = arith.addf %554, %553 : vector<2x32xf32>
    %556 = arith.divf %554, %555 : vector<2x32xf32>
    %557 = vector.extract_strided_slice %544 {offsets = [0, 64], sizes = [2, 32], strides = [1, 1]} : vector<2x128xf32> to vector<2x32xf32>
    %558 = math.tanh %557 : vector<2x32xf32>
    %559 = vector.extract_strided_slice %544 {offsets = [0, 96], sizes = [2, 32], strides = [1, 1]} : vector<2x128xf32> to vector<2x32xf32>
    %560 = arith.negf %559 : vector<2x32xf32>
    %561 = math.exp %560 : vector<2x32xf32>
    %cst_182 = arith.constant 1.000000e+00 : f32
    %562 = vector.broadcast %cst_182 : f32 to vector<2x32xf32>
    %563 = arith.addf %562, %561 : vector<2x32xf32>
    %564 = arith.divf %562, %563 : vector<2x32xf32>
    %565 = arith.mulf %556, %498 : vector<2x32xf32>
    %566 = arith.mulf %550, %558 : vector<2x32xf32>
    %567 = arith.addf %565, %566 : vector<2x32xf32>
    %568 = math.tanh %567 : vector<2x32xf32>
    %569 = arith.mulf %564, %568 : vector<2x32xf32>
    %570 = tpu.concatenate %362, %431, %500, %569 in 0 : vector<2x32xf32>, vector<2x32xf32>, vector<2x32xf32>, vector<2x32xf32> -> vector<8x32xf32>
    %571 = arith.truncf %570 : vector<8x32xf32> to vector<8x32xbf16>
    %c0_183 = arith.constant 0 : index
    %c0_184 = arith.constant 0 : index
    %572 = vector.load %arg6[%c0_183, %c0_184] : memref<32x128xbf16, #tpu.memory_space<vmem>>, vector<32x128xbf16>
    %cst_185 = arith.constant dense<0.000000e+00> : vector<8x128xf32>
    %573 = tpu.matmul %571, %572, %cst_185 {dimension_numbers = #tpu.dot_dimension_numbers<[1], [0], [0], [1], [0, 0, 1, 1], [], []>} : vector<8x32xbf16>, vector<32x128xbf16>, vector<8x128xf32> -> vector<8x128xf32>
    %c0_186 = arith.constant 0 : index
    %c0_187 = arith.constant 0 : index
    %574 = vector.load %arg7[%c0_186, %c0_187] : memref<1x128xf32, #tpu.memory_space<vmem>>, vector<1x128xf32>
    %575 = vector.broadcast %574 : vector<1x128xf32> to vector<8x128xf32>
    %576 = arith.addf %573, %575 : vector<8x128xf32>
    %c0_188 = arith.constant 0 : index
    %c0_189 = arith.constant 0 : index
    %577 = vector.load %arg8[%c0_188, %c0_189] : memref<8x128xf32, #tpu.memory_space<vmem>>, vector<8x128xf32>
    tpu.vector_store %arg8[%c0_188, %c0_189], %576 {strides = array<i32>} : memref<8x128xf32, #tpu.memory_space<vmem>>, vector<8x128xf32>,
    return
  }
}

</mosaic_0001>

<llo_original>
// kernel: model_forward.1
$region0: #{model_forward.1}
  #allocation0 [shape = 'u32[]', space=smem, size = 0x4, offset = 0x4, fixed_abs, tag = 'smem constant byte address 0x4 - core index']
  #allocation1 [shape = 'u32[144,128]{1,0:T(1,128)}', space=vmem, size = 0x12000, scoped, tag = 'internal scratch']
  %s0 = inlined_call_operand.vmem [shape: f32[16,16], index: 0, kind: input, shape index: {}]
  %s1 = inlined_call_operand.vmem [shape: f32[16,32], index: 1, kind: input, shape index: {}]
  %s2 = inlined_call_operand.vmem [shape: bf16[16,32], index: 2, kind: input, shape index: {}]
  %s3 = inlined_call_operand.vmem [shape: bf16[2,32,128], index: 3, kind: input, shape index: {}]
  %s4 = inlined_call_operand.vmem [shape: bf16[2,32,128], index: 4, kind: input, shape index: {}]
  %s5 = inlined_call_operand.vmem [shape: f32[2,1,128], index: 5, kind: input, shape index: {}]
  %s6 = inlined_call_operand.vmem [shape: bf16[32,128], index: 6, kind: input, shape index: {}]
  %s7 = inlined_call_operand.vmem [shape: f32[1,128], index: 7, kind: input, shape index: {}]
  %s8 = inlined_call_operand.vmem [shape: f32[8,128], index: 8, kind: output, shape index: {}]
  %s9 = sld [smem:[#allocation0]]
  $region42: #{model_forward.1} parent=0
    _
  %s11 = ssub.s32 1, %s9
  %s12 = scalar_select 0, %s11, %s9
  // Predicated region
  $region2: #{model_forward.1} parent=0 // pred_check
    _
  $region3: #{model_forward.1} parent=0 // pred_check_branch
    %14 = sbr.rel (0) target = $region5
  $region4: #{model_forward.1} parent=0 // pred_region
    _
  $region5: #{model_forward.1} parent=0 // pred_fallthru
    _
  // Predicated region
  $region6: #{model_forward.1} parent=0 // pred_check
    _
  $region7: #{model_forward.1} parent=0 // pred_check_branch
    %16 = sbr.rel (0) target = $region9
  $region8: #{model_forward.1} parent=0 // pred_region
    _
  $region9: #{model_forward.1} parent=0 // pred_fallthru
    _
  // Predicated region
  $region10: #{model_forward.1} parent=0 // pred_check
    _
  $region11: #{model_forward.1} parent=0 // pred_check_branch
    %18 = sbr.rel (0) target = $region13
  $region12: #{model_forward.1} parent=0 // pred_region
    _
  $region13: #{model_forward.1} parent=0 // pred_fallthru
    _
  // Predicated region
  $region14: #{model_forward.1} parent=0 // pred_check
    _
  $region15: #{model_forward.1} parent=0 // pred_check_branch
    %20 = sbr.rel (0) target = $region17
  $region16: #{model_forward.1} parent=0 // pred_region
    _
  $region17: #{model_forward.1} parent=0 // pred_fallthru
    _
  // Predicated region
  $region18: #{model_forward.1} parent=0 // pred_check
    _
  $region19: #{model_forward.1} parent=0 // pred_check_branch
    %22 = sbr.rel (0) target = $region21
  $region20: #{model_forward.1} parent=0 // pred_region
    _
  $region21: #{model_forward.1} parent=0 // pred_fallthru
    _
  // Predicated region
  $region22: #{model_forward.1} parent=0 // pred_check
    _
  $region23: #{model_forward.1} parent=0 // pred_check_branch
    %24 = sbr.rel (0) target = $region25
  $region24: #{model_forward.1} parent=0 // pred_region
    _
  $region25: #{model_forward.1} parent=0 // pred_fallthru
    _
  // Predicated region
  $region26: #{model_forward.1} parent=0 // pred_check
    _
  $region27: #{model_forward.1} parent=0 // pred_check_branch
    %26 = sbr.rel (0) target = $region29
  $region28: #{model_forward.1} parent=0 // pred_region
    _
  $region29: #{model_forward.1} parent=0 // pred_fallthru
    _
  // Predicated region
  $region30: #{model_forward.1} parent=0 // pred_check
    _
  $region31: #{model_forward.1} parent=0 // pred_check_branch
    %28 = sbr.rel (0) target = $region33
  $region32: #{model_forward.1} parent=0 // pred_region
    _
  $region33: #{model_forward.1} parent=0 // pred_fallthru
    _
  %v30 = vld [vmem:[%s0] sm:$0xff]
  %v31 = vld [vmem:[%s0 + $0x8] sm:$0xff]
  %v32 = vpack.c.bf16 %v31, %v30
  %v33 = vld [vmem:[%s2] sm:$0xf]
  %v34 = vld [vmem:[%s2 + $0x4] sm:$0xf]
  %v35 = vld [vmem:[%s1] sm:$0xff]
  %v36 = vld [vmem:[%s1 + $0x8] sm:$0xff]
  %v39 = vunpack.c.l.b16 %v33
  %v40 = vunpack.c.l.b16 %v34
  %v41 = vpack.c.b16 %v40, %v39
  %vm43 = vcmask 130048
  %v45 = vsel %vm43, %v32, 0
  %47 = vmatprep.subr.bf16.mxu0 0
  %48 = vmatpush1.bf16.msra.mxu0 %v41
  %49 = vmatprep.subr.bf16.mxu0 0
  %50 = vmatpush1.bf16.msra.mxu0 0
  %51 = vmatprep.subr.bf16.mxu0 0
  %52 = vmatpush1.bf16.msra.mxu0 0
  %53 = vmatprep.subr.bf16.mxu0 0
  %54 = vmatpush1.bf16.msra.mxu0 0
  %55 = vmatprep.subr.bf16.mxu0 0
  %56 = vmatpush1.bf16.msra.mxu0 0
  %57 = vmatprep.subr.bf16.mxu0 0
  %58 = vmatpush1.bf16.msra.mxu0 0
  %59 = vmatprep.subr.bf16.mxu0 0
  %60 = vmatpush1.bf16.msra.mxu0 0
  %61 = vmatprep.subr.bf16.mxu0 0
  %62 = vmatpush1.bf16.msra.mxu0 0
  %63 = vmatprep.subr.bf16.mxu0 0
  %64 = vmatpush1.bf16.msra.mxu0 0
  %65 = vmatprep.subr.bf16.mxu0 0
  %66 = vmatpush1.bf16.msra.mxu0 0
  %67 = vmatprep.subr.bf16.mxu0 0
  %68 = vmatpush1.bf16.msra.mxu0 0
  %69 = vmatprep.subr.bf16.mxu0 0
  %70 = vmatpush1.bf16.msra.mxu0 0
  %71 = vmatprep.subr.bf16.mxu0 0
  %72 = vmatpush1.bf16.msra.mxu0 0
  %73 = vmatprep.subr.bf16.mxu0 0
  %74 = vmatpush1.bf16.msra.mxu0 0
  %75 = vmatprep.subr.bf16.mxu0 0
  %76 = vmatpush1.bf16.msra.mxu0 0
  %77 = vmatprep.subr.bf16.mxu0 0
  %78 = vmatpush1.bf16.msra.mxu0 0
  %79 = vmatprep.mubr.bf16.mxu0 0
  %80 = vmatmul.mubr.bf16.gmra.mrb[0].mxu0 %v45
  %v81 = vpop.f32.mrb[0].mxu0
  %v82 = vadd.f32 %v35, %v81
  %v83 = vpop.f32.mrb[0].mxu0
  %v84 = vpop.f32.mrb[0].mxu0
  %v85 = vadd.f32 %v36, %v84
  %v86 = vpop.f32.mrb[0].mxu0
  %87 = vdwg.mxu0
  %v88 = vpack.c.bf16 %v85, %v82
  %v89 = vld [vmem:[%s3] sm:$0xf]
  %v90 = vld [vmem:[%s3 + $0x4] sm:$0xf]
  %v91 = vld [vmem:[%s3 + $0x8] sm:$0xf]
  %v92 = vld [vmem:[%s3 + $0xc] sm:$0xf]
  %v93 = vld [vmem:[%s5] sm:$0x1]
  %v95 = vlaneseq
  %v96 = vshrl.u32 %v95, 7
  %v97 = vsub.s32 0, %v96
  %v98 = vrot.slane %v93, %v97
  %v104 = vunpack.c.l.b16 %v89
  %v105 = vunpack.c.l.b16 %v90
  %v106 = vunpack.c.l.b16 %v91
  %v107 = vunpack.c.l.b16 %v92
  %v108 = vpack.c.b16 %v105, %v104
  %v109 = vpack.c.b16 %v107, %v106
  %vm112 = vcmask 261120
  %v114 = vsel %vm112, %v88, 0
  %116 = vmatprep.subr.bf16.mxu0 0
  %117 = vmatpush1.bf16.msra.mxu0 %v108
  %118 = vmatprep.subr.bf16.mxu0 0
  %119 = vmatpush1.bf16.msra.mxu0 %v109
  %120 = vmatprep.subr.bf16.mxu0 0
  %121 = vmatpush1.bf16.msra.mxu0 0
  %122 = vmatprep.subr.bf16.mxu0 0
  %123 = vmatpush1.bf16.msra.mxu0 0
  %124 = vmatprep.subr.bf16.mxu0 0
  %125 = vmatpush1.bf16.msra.mxu0 0
  %126 = vmatprep.subr.bf16.mxu0 0
  %127 = vmatpush1.bf16.msra.mxu0 0
  %128 = vmatprep.subr.bf16.mxu0 0
  %129 = vmatpush1.bf16.msra.mxu0 0
  %130 = vmatprep.subr.bf16.mxu0 0
  %131 = vmatpush1.bf16.msra.mxu0 0
  %132 = vmatprep.subr.bf16.mxu0 0
  %133 = vmatpush1.bf16.msra.mxu0 0
  %134 = vmatprep.subr.bf16.mxu0 0
  %135 = vmatpush1.bf16.msra.mxu0 0
  %136 = vmatprep.subr.bf16.mxu0 0
  %137 = vmatpush1.bf16.msra.mxu0 0
  %138 = vmatprep.subr.bf16.mxu0 0
  %139 = vmatpush1.bf16.msra.mxu0 0
  %140 = vmatprep.subr.bf16.mxu0 0
  %141 = vmatpush1.bf16.msra.mxu0 0
  %142 = vmatprep.subr.bf16.mxu0 0
  %143 = vmatpush1.bf16.msra.mxu0 0
  %144 = vmatprep.subr.bf16.mxu0 0
  %145 = vmatpush1.bf16.msra.mxu0 0
  %146 = vmatprep.subr.bf16.mxu0 0
  %147 = vmatpush1.bf16.msra.mxu0 0
  %148 = vmatprep.mubr.bf16.mxu0 0
  %149 = vmatmul.mubr.bf16.gmra.mrb[0].mxu0 %v114
  %v150 = vpop.f32.mrb[0].mxu0
  %v151 = vadd.f32 %v98, %v150
  %v152 = vpop.f32.mrb[0].mxu0
  %v153 = vpop.f32.mrb[0].mxu0
  %v154 = vadd.f32 %v98, %v153
  %v155 = vpop.f32.mrb[0].mxu0
  %156 = vdwg.mxu0
  %v157 = vld [vmem:[%s4] sm:$0xf]
  %v158 = vld [vmem:[%s4 + $0x4] sm:$0xf]
  %v159 = vld [vmem:[%s4 + $0x8] sm:$0xf]
  %v160 = vld [vmem:[%s4 + $0xc] sm:$0xf]
  %v165 = vunpack.c.l.b16 %v157
  %v166 = vunpack.c.l.b16 %v158
  %v167 = vunpack.c.l.b16 %v159
  %v168 = vunpack.c.l.b16 %v160
  %v169 = vpack.c.b16 %v166, %v165
  %v170 = vpack.c.b16 %v168, %v167
  %v174 = vsel %vm112, 0, 0
  %176 = vmatprep.subr.bf16.mxu0 0
  %177 = vmatpush1.bf16.msra.mxu0 %v169
  %178 = vmatprep.subr.bf16.mxu0 0
  %179 = vmatpush1.bf16.msra.mxu0 %v170
  %180 = vmatprep.subr.bf16.mxu0 0
  %181 = vmatpush1.bf16.msra.mxu0 0
  %182 = vmatprep.subr.bf16.mxu0 0
  %183 = vmatpush1.bf16.msra.mxu0 0
  %184 = vmatprep.subr.bf16.mxu0 0
  %185 = vmatpush1.bf16.msra.mxu0 0
  %186 = vmatprep.subr.bf16.mxu0 0
  %187 = vmatpush1.bf16.msra.mxu0 0
  %188 = vmatprep.subr.bf16.mxu0 0
  %189 = vmatpush1.bf16.msra.mxu0 0
  %190 = vmatprep.subr.bf16.mxu0 0
  %191 = vmatpush1.bf16.msra.mxu0 0
  %192 = vmatprep.subr.bf16.mxu0 0
  %193 = vmatpush1.bf16.msra.mxu0 0
  %194 = vmatprep.subr.bf16.mxu0 0
  %195 = vmatpush1.bf16.msra.mxu0 0
  %196 = vmatprep.subr.bf16.mxu0 0
  %197 = vmatpush1.bf16.msra.mxu0 0
  %198 = vmatprep.subr.bf16.mxu0 0
  %199 = vmatpush1.bf16.msra.mxu0 0
  %200 = vmatprep.subr.bf16.mxu0 0
  %201 = vmatpush1.bf16.msra.mxu0 0
  %202 = vmatprep.subr.bf16.mxu0 0
  %203 = vmatpush1.bf16.msra.mxu0 0
  %204 = vmatprep.subr.bf16.mxu0 0
  %205 = vmatpush1.bf16.msra.mxu0 0
  %206 = vmatprep.subr.bf16.mxu0 0
  %207 = vmatpush1.bf16.msra.mxu0 0
  %208 = vmatprep.mubr.bf16.mxu0 0
  %209 = vmatmul.mubr.bf16.gmra.mrb[0].mxu0 %v174
  %v210 = vpop.f32.mrb[0].mxu0
  %v211 = vadd.f32 0.0, %v210
  %v212 = vpop.f32.mrb[0].mxu0
  %v213 = vpop.f32.mrb[0].mxu0
  %v214 = vpop.f32.mrb[0].mxu0
  %215 = vdwg.mxu0
  %v216 = vadd.f32 %v151, %v211
  %v217 = vxor.u32 %v216, 2147483648
  %v218 = vmul.f32 %v217, 1.442695
  %v219 = vpow.pop %v218
  %v220 = vadd.f32 %v219, 1.0
  %v221 = vrcp.pop %v220
  %v222 = vmul.f32 1.0, %v221
  %v223 = vtanh.pop %v216
  %v224 = vmul.f32 %v222, 0.0
  %226 = vrot.lane.b32.xlu0 %v223, 64
  %v227 = vpop.permute.xlu0 %226
  %v229 = vmul.f32 %v222, %v227
  %231 = vrot.lane.b32.xlu0 %v229, 32
  %v232 = vpop.permute.xlu0 %231
  %v234 = vadd.f32 %v224, %v232
  %v235 = vtanh.pop %v234
  %237 = vrot.lane.b32.xlu0 %v235, 64
  %v238 = vpop.permute.xlu0 %237
  %v240 = vmul.f32 %v222, %v238
  %v241 = vpack.c.bf16 %v240, %v240
  %s242 = scalar_lea.vmem %s3, 16
  %v243 = vld [vmem:[%s242] sm:$0xf]
  %v244 = vld [vmem:[%s242 + $0x4] sm:$0xf]
  %v245 = vld [vmem:[%s242 + $0x8] sm:$0xf]
  %v246 = vld [vmem:[%s242 + $0xc] sm:$0xf]
  %s247 = scalar_lea.vmem %s5, 1
  %v248 = vld [vmem:[%s247] sm:$0x1]
  %v250 = vlaneseq
  %v251 = vshrl.u32 %v250, 7
  %v252 = vsub.s32 0, %v251
  %v253 = vrot.slane %v248, %v252
  %256 = vrot.lane.b32.xlu0 %v241, 32
  %v257 = vpop.permute.xlu0 %256
  %v262 = vunpack.c.l.b16 %v243
  %v263 = vunpack.c.l.b16 %v244
  %v264 = vunpack.c.l.b16 %v245
  %v265 = vunpack.c.l.b16 %v246
  %v266 = vpack.c.b16 %v263, %v262
  %v267 = vpack.c.b16 %v265, %v264
  %v271 = vsel %vm112, %v257, 0
  %273 = vmatprep.subr.bf16.mxu0 0
  %274 = vmatpush1.bf16.msra.mxu0 %v266
  %275 = vmatprep.subr.bf16.mxu0 0
  %276 = vmatpush1.bf16.msra.mxu0 %v267
  %277 = vmatprep.subr.bf16.mxu0 0
  %278 = vmatpush1.bf16.msra.mxu0 0
  %279 = vmatprep.subr.bf16.mxu0 0
  %280 = vmatpush1.bf16.msra.mxu0 0
  %281 = vmatprep.subr.bf16.mxu0 0
  %282 = vmatpush1.bf16.msra.mxu0 0
  %283 = vmatprep.subr.bf16.mxu0 0
  %284 = vmatpush1.bf16.msra.mxu0 0
  %285 = vmatprep.subr.bf16.mxu0 0
  %286 = vmatpush1.bf16.msra.mxu0 0
  %287 = vmatprep.subr.bf16.mxu0 0
  %288 = vmatpush1.bf16.msra.mxu0 0
  %289 = vmatprep.subr.bf16.mxu0 0
  %290 = vmatpush1.bf16.msra.mxu0 0
  %291 = vmatprep.subr.bf16.mxu0 0
  %292 = vmatpush1.bf16.msra.mxu0 0
  %293 = vmatprep.subr.bf16.mxu0 0
  %294 = vmatpush1.bf16.msra.mxu0 0
  %295 = vmatprep.subr.bf16.mxu0 0
  %296 = vmatpush1.bf16.msra.mxu0 0
  %297 = vmatprep.subr.bf16.mxu0 0
  %298 = vmatpush1.bf16.msra.mxu0 0
  %299 = vmatprep.subr.bf16.mxu0 0
  %300 = vmatpush1.bf16.msra.mxu0 0
  %301 = vmatprep.subr.bf16.mxu0 0
  %302 = vmatpush1.bf16.msra.mxu0 0
  %303 = vmatprep.subr.bf16.mxu0 0
  %304 = vmatpush1.bf16.msra.mxu0 0
  %305 = vmatprep.mubr.bf16.mxu0 0
  %306 = vmatmul.mubr.bf16.gmra.mrb[0].mxu0 %v271
  %v307 = vpop.f32.mrb[0].mxu0
  %v308 = vadd.f32 %v253, %v307
  %v309 = vpop.f32.mrb[0].mxu0
  %v310 = vpop.f32.mrb[0].mxu0
  %v311 = vpop.f32.mrb[0].mxu0
  %312 = vdwg.mxu0
  %s313 = scalar_lea.vmem %s4, 16
  %v314 = vld [vmem:[%s313] sm:$0xf]
  %v315 = vld [vmem:[%s313 + $0x4] sm:$0xf]
  %v316 = vld [vmem:[%s313 + $0x8] sm:$0xf]
  %v317 = vld [vmem:[%s313 + $0xc] sm:$0xf]
  %v322 = vunpack.c.l.b16 %v314
  %v323 = vunpack.c.l.b16 %v315
  %v324 = vunpack.c.l.b16 %v316
  %v325 = vunpack.c.l.b16 %v317
  %v326 = vpack.c.b16 %v323, %v322
  %v327 = vpack.c.b16 %v325, %v324
  %330 = vmatprep.subr.bf16.mxu0 0
  %331 = vmatpush1.bf16.msra.mxu0 %v326
  %332 = vmatprep.subr.bf16.mxu0 0
  %333 = vmatpush1.bf16.msra.mxu0 %v327
  %334 = vmatprep.subr.bf16.mxu0 0
  %335 = vmatpush1.bf16.msra.mxu0 0
  %336 = vmatprep.subr.bf16.mxu0 0
  %337 = vmatpush1.bf16.msra.mxu0 0
  %338 = vmatprep.subr.bf16.mxu0 0
  %339 = vmatpush1.bf16.msra.mxu0 0
  %340 = vmatprep.subr.bf16.mxu0 0
  %341 = vmatpush1.bf16.msra.mxu0 0
  %342 = vmatprep.subr.bf16.mxu0 0
  %343 = vmatpush1.bf16.msra.mxu0 0
  %344 = vmatprep.subr.bf16.mxu0 0
  %345 = vmatpush1.bf16.msra.mxu0 0
  %346 = vmatprep.subr.bf16.mxu0 0
  %347 = vmatpush1.bf16.msra.mxu0 0
  %348 = vmatprep.subr.bf16.mxu0 0
  %349 = vmatpush1.bf16.msra.mxu0 0
  %350 = vmatprep.subr.bf16.mxu0 0
  %351 = vmatpush1.bf16.msra.mxu0 0
  %352 = vmatprep.subr.bf16.mxu0 0
  %353 = vmatpush1.bf16.msra.mxu0 0
  %354 = vmatprep.subr.bf16.mxu0 0
  %355 = vmatpush1.bf16.msra.mxu0 0
  %356 = vmatprep.subr.bf16.mxu0 0
  %357 = vmatpush1.bf16.msra.mxu0 0
  %358 = vmatprep.subr.bf16.mxu0 0
  %359 = vmatpush1.bf16.msra.mxu0 0
  %360 = vmatprep.subr.bf16.mxu0 0
  %361 = vmatpush1.bf16.msra.mxu0 0
  %362 = vmatprep.mubr.bf16.mxu0 0
  %363 = vmatmul.mubr.bf16.gmra.mrb[0].mxu0 %v174
  %v364 = vpop.f32.mrb[0].mxu0
  %v365 = vadd.f32 0.0, %v364
  %v366 = vpop.f32.mrb[0].mxu0
  %v367 = vpop.f32.mrb[0].mxu0
  %v368 = vpop.f32.mrb[0].mxu0
  %369 = vdwg.mxu0
  %v370 = vadd.f32 %v308, %v365
  %v371 = vxor.u32 %v370, 2147483648
  %v372 = vmul.f32 %v371, 1.442695
  %v373 = vpow.pop %v372
  %v374 = vadd.f32 %v373, 1.0
  %v375 = vrcp.pop %v374
  %v376 = vmul.f32 1.0, %v375
  %v377 = vtanh.pop %v370
  %v378 = vmul.f32 %v376, 0.0
  %380 = vrot.lane.b32.xlu0 %v377, 64
  %v381 = vpop.permute.xlu0 %380
  %v383 = vmul.f32 %v376, %v381
  %385 = vrot.lane.b32.xlu0 %v383, 32
  %v386 = vpop.permute.xlu0 %385
  %v388 = vadd.f32 %v378, %v386
  %v389 = vtanh.pop %v388
  %391 = vrot.lane.b32.xlu0 %v389, 64
  %v392 = vpop.permute.xlu0 %391
  %v394 = vmul.f32 %v376, %v392
  %395 = vmatprep.subr.bf16.mxu0 0
  %396 = vmatpush1.bf16.msra.mxu0 %v169
  %397 = vmatprep.subr.bf16.mxu0 0
  %398 = vmatpush1.bf16.msra.mxu0 %v170
  %399 = vmatprep.subr.bf16.mxu0 0
  %400 = vmatpush1.bf16.msra.mxu0 0
  %401 = vmatprep.subr.bf16.mxu0 0
  %402 = vmatpush1.bf16.msra.mxu0 0
  %403 = vmatprep.subr.bf16.mxu0 0
  %404 = vmatpush1.bf16.msra.mxu0 0
  %405 = vmatprep.subr.bf16.mxu0 0
  %406 = vmatpush1.bf16.msra.mxu0 0
  %407 = vmatprep.subr.bf16.mxu0 0
  %408 = vmatpush1.bf16.msra.mxu0 0
  %409 = vmatprep.subr.bf16.mxu0 0
  %410 = vmatpush1.bf16.msra.mxu0 0
  %411 = vmatprep.subr.bf16.mxu0 0
  %412 = vmatpush1.bf16.msra.mxu0 0
  %413 = vmatprep.subr.bf16.mxu0 0
  %414 = vmatpush1.bf16.msra.mxu0 0
  %415 = vmatprep.subr.bf16.mxu0 0
  %416 = vmatpush1.bf16.msra.mxu0 0
  %417 = vmatprep.subr.bf16.mxu0 0
  %418 = vmatpush1.bf16.msra.mxu0 0
  %419 = vmatprep.subr.bf16.mxu0 0
  %420 = vmatpush1.bf16.msra.mxu0 0
  %421 = vmatprep.subr.bf16.mxu0 0
  %422 = vmatpush1.bf16.msra.mxu0 0
  %423 = vmatprep.subr.bf16.mxu0 0
  %424 = vmatpush1.bf16.msra.mxu0 0
  %425 = vmatprep.subr.bf16.mxu0 0
  %426 = vmatpush1.bf16.msra.mxu0 0
  %427 = vmatprep.mubr.bf16.mxu0 0
  %428 = vmatmul.mubr.bf16.gmra.mrb[0].mxu0 %v271
  %v429 = vpop.f32.mrb[0].mxu0
  %v430 = vadd.f32 0.0, %v429
  %v431 = vpop.f32.mrb[0].mxu0
  %v432 = vpop.f32.mrb[0].mxu0
  %v433 = vpop.f32.mrb[0].mxu0
  %434 = vdwg.mxu0
  %v436 = vrot.slane %v430, 6
  %v438 = vadd.f32 %v151, %v436
  %v439 = vxor.u32 %v438, 2147483648
  %v440 = vmul.f32 %v439, 1.442695
  %v441 = vpow.pop %v440
  %v442 = vadd.f32 %v441, 1.0
  %v443 = vrcp.pop %v442
  %v444 = vmul.f32 1.0, %v443
  %v445 = vtanh.pop %v438
  %v447 = vrot.slane %v234, 6
  %v449 = vmul.f32 %v444, %v447
  %451 = vrot.lane.b32.xlu0 %v445, 64
  %v452 = vpop.permute.xlu0 %451
  %v454 = vmul.f32 %v444, %v452
  %456 = vrot.lane.b32.xlu0 %v454, 32
  %v457 = vpop.permute.xlu0 %456
  %v459 = vadd.f32 %v449, %v457
  %v460 = vtanh.pop %v459
  %462 = vrot.lane.b32.xlu0 %v460, 64
  %v463 = vpop.permute.xlu0 %462
  %v465 = vmul.f32 %v444, %v463
  %v466 = vpack.c.bf16 %v465, %v465
  %v468 = vrot.slane %v466, 1
  %469 = vrot.lane.b32.xlu0 %v468, 32
  %v470 = vpop.permute.xlu0 %469
  %v472 = vsel %vm112, %v470, 0
  %474 = vmatprep.subr.bf16.mxu0 0
  %475 = vmatpush1.bf16.msra.mxu0 %v266
  %476 = vmatprep.subr.bf16.mxu0 0
  %477 = vmatpush1.bf16.msra.mxu0 %v267
  %478 = vmatprep.subr.bf16.mxu0 0
  %479 = vmatpush1.bf16.msra.mxu0 0
  %480 = vmatprep.subr.bf16.mxu0 0
  %481 = vmatpush1.bf16.msra.mxu0 0
  %482 = vmatprep.subr.bf16.mxu0 0
  %483 = vmatpush1.bf16.msra.mxu0 0
  %484 = vmatprep.subr.bf16.mxu0 0
  %485 = vmatpush1.bf16.msra.mxu0 0
  %486 = vmatprep.subr.bf16.mxu0 0
  %487 = vmatpush1.bf16.msra.mxu0 0
  %488 = vmatprep.subr.bf16.mxu0 0
  %489 = vmatpush1.bf16.msra.mxu0 0
  %490 = vmatprep.subr.bf16.mxu0 0
  %491 = vmatpush1.bf16.msra.mxu0 0
  %492 = vmatprep.subr.bf16.mxu0 0
  %493 = vmatpush1.bf16.msra.mxu0 0
  %494 = vmatprep.subr.bf16.mxu0 0
  %495 = vmatpush1.bf16.msra.mxu0 0
  %496 = vmatprep.subr.bf16.mxu0 0
  %497 = vmatpush1.bf16.msra.mxu0 0
  %498 = vmatprep.subr.bf16.mxu0 0
  %499 = vmatpush1.bf16.msra.mxu0 0
  %500 = vmatprep.subr.bf16.mxu0 0
  %501 = vmatpush1.bf16.msra.mxu0 0
  %502 = vmatprep.subr.bf16.mxu0 0
  %503 = vmatpush1.bf16.msra.mxu0 0
  %504 = vmatprep.subr.bf16.mxu0 0
  %505 = vmatpush1.bf16.msra.mxu0 0
  %506 = vmatprep.mubr.bf16.mxu0 0
  %507 = vmatmul.mubr.bf16.gmra.mrb[0].mxu0 %v472
  %v508 = vpop.f32.mrb[0].mxu0
  %v509 = vadd.f32 %v253, %v508
  %v510 = vpop.f32.mrb[0].mxu0
  %v511 = vpop.f32.mrb[0].mxu0
  %v512 = vpop.f32.mrb[0].mxu0
  %513 = vdwg.mxu0
  %v514 = vpack.c.bf16 %v394, %v394
  %516 = vrot.lane.b32.xlu0 %v514, 32
  %v517 = vpop.permute.xlu0 %516
  %v519 = vsel %vm112, %v517, 0
  %521 = vmatprep.subr.bf16.mxu0 0
  %522 = vmatpush1.bf16.msra.mxu0 %v326
  %523 = vmatprep.subr.bf16.mxu0 0
  %524 = vmatpush1.bf16.msra.mxu0 %v327
  %525 = vmatprep.subr.bf16.mxu0 0
  %526 = vmatpush1.bf16.msra.mxu0 0
  %527 = vmatprep.subr.bf16.mxu0 0
  %528 = vmatpush1.bf16.msra.mxu0 0
  %529 = vmatprep.subr.bf16.mxu0 0
  %530 = vmatpush1.bf16.msra.mxu0 0
  %531 = vmatprep.subr.bf16.mxu0 0
  %532 = vmatpush1.bf16.msra.mxu0 0
  %533 = vmatprep.subr.bf16.mxu0 0
  %534 = vmatpush1.bf16.msra.mxu0 0
  %535 = vmatprep.subr.bf16.mxu0 0
  %536 = vmatpush1.bf16.msra.mxu0 0
  %537 = vmatprep.subr.bf16.mxu0 0
  %538 = vmatpush1.bf16.msra.mxu0 0
  %539 = vmatprep.subr.bf16.mxu0 0
  %540 = vmatpush1.bf16.msra.mxu0 0
  %541 = vmatprep.subr.bf16.mxu0 0
  %542 = vmatpush1.bf16.msra.mxu0 0
  %543 = vmatprep.subr.bf16.mxu0 0
  %544 = vmatpush1.bf16.msra.mxu0 0
  %545 = vmatprep.subr.bf16.mxu0 0
  %546 = vmatpush1.bf16.msra.mxu0 0
  %547 = vmatprep.subr.bf16.mxu0 0
  %548 = vmatpush1.bf16.msra.mxu0 0
  %549 = vmatprep.subr.bf16.mxu0 0
  %550 = vmatpush1.bf16.msra.mxu0 0
  %551 = vmatprep.subr.bf16.mxu0 0
  %552 = vmatpush1.bf16.msra.mxu0 0
  %553 = vmatprep.mubr.bf16.mxu0 0
  %554 = vmatmul.mubr.bf16.gmra.mrb[0].mxu0 %v519
  %v555 = vpop.f32.mrb[0].mxu0
  %v556 = vadd.f32 0.0, %v555
  %v557 = vpop.f32.mrb[0].mxu0
  %v558 = vpop.f32.mrb[0].mxu0
  %v559 = vpop.f32.mrb[0].mxu0
  %560 = vdwg.mxu0
  %v561 = vadd.f32 %v509, %v556
  %v562 = vxor.u32 %v561, 2147483648
  %v563 = vmul.f32 %v562, 1.442695
  %v564 = vpow.pop %v563
  %v565 = vadd.f32 %v564, 1.0
  %v566 = vrcp.pop %v565
  %v567 = vmul.f32 1.0, %v566
  %v568 = vtanh.pop %v561
  %v569 = vmul.f32 %v567, %v388
  %571 = vrot.lane.b32.xlu0 %v568, 64
  %v572 = vpop.permute.xlu0 %571
  %v574 = vmul.f32 %v567, %v572
  %576 = vrot.lane.b32.xlu0 %v574, 32
  %v577 = vpop.permute.xlu0 %576
  %v579 = vadd.f32 %v569, %v577
  %v580 = vtanh.pop %v579
  %582 = vrot.lane.b32.xlu0 %v580, 64
  %v583 = vpop.permute.xlu0 %582
  %v585 = vmul.f32 %v567, %v583
  %586 = vmatprep.subr.bf16.mxu0 0
  %587 = vmatpush1.bf16.msra.mxu0 %v169
  %588 = vmatprep.subr.bf16.mxu0 0
  %589 = vmatpush1.bf16.msra.mxu0 %v170
  %590 = vmatprep.subr.bf16.mxu0 0
  %591 = vmatpush1.bf16.msra.mxu0 0
  %592 = vmatprep.subr.bf16.mxu0 0
  %593 = vmatpush1.bf16.msra.mxu0 0
  %594 = vmatprep.subr.bf16.mxu0 0
  %595 = vmatpush1.bf16.msra.mxu0 0
  %596 = vmatprep.subr.bf16.mxu0 0
  %597 = vmatpush1.bf16.msra.mxu0 0
  %598 = vmatprep.subr.bf16.mxu0 0
  %599 = vmatpush1.bf16.msra.mxu0 0
  %600 = vmatprep.subr.bf16.mxu0 0
  %601 = vmatpush1.bf16.msra.mxu0 0
  %602 = vmatprep.subr.bf16.mxu0 0
  %603 = vmatpush1.bf16.msra.mxu0 0
  %604 = vmatprep.subr.bf16.mxu0 0
  %605 = vmatpush1.bf16.msra.mxu0 0
  %606 = vmatprep.subr.bf16.mxu0 0
  %607 = vmatpush1.bf16.msra.mxu0 0
  %608 = vmatprep.subr.bf16.mxu0 0
  %609 = vmatpush1.bf16.msra.mxu0 0
  %610 = vmatprep.subr.bf16.mxu0 0
  %611 = vmatpush1.bf16.msra.mxu0 0
  %612 = vmatprep.subr.bf16.mxu0 0
  %613 = vmatpush1.bf16.msra.mxu0 0
  %614 = vmatprep.subr.bf16.mxu0 0
  %615 = vmatpush1.bf16.msra.mxu0 0
  %616 = vmatprep.subr.bf16.mxu0 0
  %617 = vmatpush1.bf16.msra.mxu0 0
  %618 = vmatprep.mubr.bf16.mxu0 0
  %619 = vmatmul.mubr.bf16.gmra.mrb[0].mxu0 %v472
  %v620 = vpop.f32.mrb[0].mxu0
  %v621 = vadd.f32 0.0, %v620
  %v622 = vpop.f32.mrb[0].mxu0
  %v623 = vpop.f32.mrb[0].mxu0
  %v624 = vpop.f32.mrb[0].mxu0
  %625 = vdwg.mxu0
  %v627 = vrot.slane %v621, 4
  %v629 = vadd.f32 %v151, %v627
  %v630 = vxor.u32 %v629, 2147483648
  %v631 = vmul.f32 %v630, 1.442695
  %v632 = vpow.pop %v631
  %v633 = vadd.f32 %v632, 1.0
  %v634 = vrcp.pop %v633
  %v635 = vmul.f32 1.0, %v634
  %v636 = vtanh.pop %v629
  %v638 = vrot.slane %v459, 6
  %v640 = vmul.f32 %v635, %v638
  %642 = vrot.lane.b32.xlu0 %v636, 64
  %v643 = vpop.permute.xlu0 %642
  %v645 = vmul.f32 %v635, %v643
  %647 = vrot.lane.b32.xlu0 %v645, 32
  %v648 = vpop.permute.xlu0 %647
  %v650 = vadd.f32 %v640, %v648
  %v651 = vtanh.pop %v650
  %653 = vrot.lane.b32.xlu0 %v651, 64
  %v654 = vpop.permute.xlu0 %653
  %v656 = vmul.f32 %v635, %v654
  %v657 = vpack.c.bf16 %v656, %v656
  %v659 = vrot.slane %v657, 2
  %660 = vrot.lane.b32.xlu0 %v659, 32
  %v661 = vpop.permute.xlu0 %660
  %v663 = vsel %vm112, %v661, 0
  %665 = vmatprep.subr.bf16.mxu0 0
  %666 = vmatpush1.bf16.msra.mxu0 %v266
  %667 = vmatprep.subr.bf16.mxu0 0
  %668 = vmatpush1.bf16.msra.mxu0 %v267
  %669 = vmatprep.subr.bf16.mxu0 0
  %670 = vmatpush1.bf16.msra.mxu0 0
  %671 = vmatprep.subr.bf16.mxu0 0
  %672 = vmatpush1.bf16.msra.mxu0 0
  %673 = vmatprep.subr.bf16.mxu0 0
  %674 = vmatpush1.bf16.msra.mxu0 0
  %675 = vmatprep.subr.bf16.mxu0 0
  %676 = vmatpush1.bf16.msra.mxu0 0
  %677 = vmatprep.subr.bf16.mxu0 0
  %678 = vmatpush1.bf16.msra.mxu0 0
  %679 = vmatprep.subr.bf16.mxu0 0
  %680 = vmatpush1.bf16.msra.mxu0 0
  %681 = vmatprep.subr.bf16.mxu0 0
  %682 = vmatpush1.bf16.msra.mxu0 0
  %683 = vmatprep.subr.bf16.mxu0 0
  %684 = vmatpush1.bf16.msra.mxu0 0
  %685 = vmatprep.subr.bf16.mxu0 0
  %686 = vmatpush1.bf16.msra.mxu0 0
  %687 = vmatprep.subr.bf16.mxu0 0
  %688 = vmatpush1.bf16.msra.mxu0 0
  %689 = vmatprep.subr.bf16.mxu0 0
  %690 = vmatpush1.bf16.msra.mxu0 0
  %691 = vmatprep.subr.bf16.mxu0 0
  %692 = vmatpush1.bf16.msra.mxu0 0
  %693 = vmatprep.subr.bf16.mxu0 0
  %694 = vmatpush1.bf16.msra.mxu0 0
  %695 = vmatprep.subr.bf16.mxu0 0
  %696 = vmatpush1.bf16.msra.mxu0 0
  %697 = vmatprep.mubr.bf16.mxu0 0
  %698 = vmatmul.mubr.bf16.gmra.mrb[0].mxu0 %v663
  %v699 = vpop.f32.mrb[0].mxu0
  %v700 = vadd.f32 %v253, %v699
  %v701 = vpop.f32.mrb[0].mxu0
  %v702 = vpop.f32.mrb[0].mxu0
  %v703 = vpop.f32.mrb[0].mxu0
  %704 = vdwg.mxu0
  %v705 = vpack.c.bf16 %v585, %v585
  %707 = vrot.lane.b32.xlu0 %v705, 32
  %v708 = vpop.permute.xlu0 %707
  %v710 = vsel %vm112, %v708, 0
  %712 = vmatprep.subr.bf16.mxu0 0
  %713 = vmatpush1.bf16.msra.mxu0 %v326
  %714 = vmatprep.subr.bf16.mxu0 0
  %715 = vmatpush1.bf16.msra.mxu0 %v327
  %716 = vmatprep.subr.bf16.mxu0 0
  %717 = vmatpush1.bf16.msra.mxu0 0
  %718 = vmatprep.subr.bf16.mxu0 0
  %719 = vmatpush1.bf16.msra.mxu0 0
  %720 = vmatprep.subr.bf16.mxu0 0
  %721 = vmatpush1.bf16.msra.mxu0 0
  %722 = vmatprep.subr.bf16.mxu0 0
  %723 = vmatpush1.bf16.msra.mxu0 0
  %724 = vmatprep.subr.bf16.mxu0 0
  %725 = vmatpush1.bf16.msra.mxu0 0
  %726 = vmatprep.subr.bf16.mxu0 0
  %727 = vmatpush1.bf16.msra.mxu0 0
  %728 = vmatprep.subr.bf16.mxu0 0
  %729 = vmatpush1.bf16.msra.mxu0 0
  %730 = vmatprep.subr.bf16.mxu0 0
  %731 = vmatpush1.bf16.msra.mxu0 0
  %732 = vmatprep.subr.bf16.mxu0 0
  %733 = vmatpush1.bf16.msra.mxu0 0
  %734 = vmatprep.subr.bf16.mxu0 0
  %735 = vmatpush1.bf16.msra.mxu0 0
  %736 = vmatprep.subr.bf16.mxu0 0
  %737 = vmatpush1.bf16.msra.mxu0 0
  %738 = vmatprep.subr.bf16.mxu0 0
  %739 = vmatpush1.bf16.msra.mxu0 0
  %740 = vmatprep.subr.bf16.mxu0 0
  %741 = vmatpush1.bf16.msra.mxu0 0
  %742 = vmatprep.subr.bf16.mxu0 0
  %743 = vmatpush1.bf16.msra.mxu0 0
  %744 = vmatprep.mubr.bf16.mxu0 0
  %745 = vmatmul.mubr.bf16.gmra.mrb[0].mxu0 %v710
  %v746 = vpop.f32.mrb[0].mxu0
  %v747 = vadd.f32 0.0, %v746
  %v748 = vpop.f32.mrb[0].mxu0
  %v749 = vpop.f32.mrb[0].mxu0
  %v750 = vpop.f32.mrb[0].mxu0
  %751 = vdwg.mxu0
  %v752 = vadd.f32 %v700, %v747
  %v753 = vxor.u32 %v752, 2147483648
  %v754 = vmul.f32 %v753, 1.442695
  %v755 = vpow.pop %v754
  %v756 = vadd.f32 %v755, 1.0
  %v757 = vrcp.pop %v756
  %v758 = vmul.f32 1.0, %v757
  %v759 = vtanh.pop %v752
  %v760 = vmul.f32 %v758, %v579
  %762 = vrot.lane.b32.xlu0 %v759, 64
  %v763 = vpop.permute.xlu0 %762
  %v765 = vmul.f32 %v758, %v763
  %767 = vrot.lane.b32.xlu0 %v765, 32
  %v768 = vpop.permute.xlu0 %767
  %v770 = vadd.f32 %v760, %v768
  %v771 = vtanh.pop %v770
  %773 = vrot.lane.b32.xlu0 %v771, 64
  %v774 = vpop.permute.xlu0 %773
  %v776 = vmul.f32 %v758, %v774
  %777 = vmatprep.subr.bf16.mxu0 0
  %778 = vmatpush1.bf16.msra.mxu0 %v169
  %779 = vmatprep.subr.bf16.mxu0 0
  %780 = vmatpush1.bf16.msra.mxu0 %v170
  %781 = vmatprep.subr.bf16.mxu0 0
  %782 = vmatpush1.bf16.msra.mxu0 0
  %783 = vmatprep.subr.bf16.mxu0 0
  %784 = vmatpush1.bf16.msra.mxu0 0
  %785 = vmatprep.subr.bf16.mxu0 0
  %786 = vmatpush1.bf16.msra.mxu0 0
  %787 = vmatprep.subr.bf16.mxu0 0
  %788 = vmatpush1.bf16.msra.mxu0 0
  %789 = vmatprep.subr.bf16.mxu0 0
  %790 = vmatpush1.bf16.msra.mxu0 0
  %791 = vmatprep.subr.bf16.mxu0 0
  %792 = vmatpush1.bf16.msra.mxu0 0
  %793 = vmatprep.subr.bf16.mxu0 0
  %794 = vmatpush1.bf16.msra.mxu0 0
  %795 = vmatprep.subr.bf16.mxu0 0
  %796 = vmatpush1.bf16.msra.mxu0 0
  %797 = vmatprep.subr.bf16.mxu0 0
  %798 = vmatpush1.bf16.msra.mxu0 0
  %799 = vmatprep.subr.bf16.mxu0 0
  %800 = vmatpush1.bf16.msra.mxu0 0
  %801 = vmatprep.subr.bf16.mxu0 0
  %802 = vmatpush1.bf16.msra.mxu0 0
  %803 = vmatprep.subr.bf16.mxu0 0
  %804 = vmatpush1.bf16.msra.mxu0 0
  %805 = vmatprep.subr.bf16.mxu0 0
  %806 = vmatpush1.bf16.msra.mxu0 0
  %807 = vmatprep.subr.bf16.mxu0 0
  %808 = vmatpush1.bf16.msra.mxu0 0
  %809 = vmatprep.mubr.bf16.mxu0 0
  %810 = vmatmul.mubr.bf16.gmra.mrb[0].mxu0 %v663
  %v811 = vpop.f32.mrb[0].mxu0
  %v812 = vadd.f32 0.0, %v811
  %v813 = vpop.f32.mrb[0].mxu0
  %v814 = vpop.f32.mrb[0].mxu0
  %v815 = vpop.f32.mrb[0].mxu0
  %816 = vdwg.mxu0
  %v818 = vrot.slane %v812, 2
  %v820 = vadd.f32 %v151, %v818
  %v821 = vxor.u32 %v820, 2147483648
  %v822 = vmul.f32 %v821, 1.442695
  %v823 = vpow.pop %v822
  %v824 = vadd.f32 %v823, 1.0
  %v825 = vrcp.pop %v824
  %v826 = vmul.f32 1.0, %v825
  %v827 = vtanh.pop %v820
  %v829 = vrot.slane %v650, 6
  %v831 = vmul.f32 %v826, %v829
  %833 = vrot.lane.b32.xlu0 %v827, 64
  %v834 = vpop.permute.xlu0 %833
  %v836 = vmul.f32 %v826, %v834
  %838 = vrot.lane.b32.xlu0 %v836, 32
  %v839 = vpop.permute.xlu0 %838
  %v841 = vadd.f32 %v831, %v839
  %v842 = vtanh.pop %v841
  %844 = vrot.lane.b32.xlu0 %v842, 64
  %v845 = vpop.permute.xlu0 %844
  %v847 = vmul.f32 %v826, %v845
  %v848 = vpack.c.bf16 %v847, %v847
  %v850 = vrot.slane %v848, 3
  %851 = vrot.lane.b32.xlu0 %v850, 32
  %v852 = vpop.permute.xlu0 %851
  %v854 = vsel %vm112, %v852, 0
  %856 = vmatprep.subr.bf16.mxu0 0
  %857 = vmatpush1.bf16.msra.mxu0 %v266
  %858 = vmatprep.subr.bf16.mxu0 0
  %859 = vmatpush1.bf16.msra.mxu0 %v267
  %860 = vmatprep.subr.bf16.mxu0 0
  %861 = vmatpush1.bf16.msra.mxu0 0
  %862 = vmatprep.subr.bf16.mxu0 0
  %863 = vmatpush1.bf16.msra.mxu0 0
  %864 = vmatprep.subr.bf16.mxu0 0
  %865 = vmatpush1.bf16.msra.mxu0 0
  %866 = vmatprep.subr.bf16.mxu0 0
  %867 = vmatpush1.bf16.msra.mxu0 0
  %868 = vmatprep.subr.bf16.mxu0 0
  %869 = vmatpush1.bf16.msra.mxu0 0
  %870 = vmatprep.subr.bf16.mxu0 0
  %871 = vmatpush1.bf16.msra.mxu0 0
  %872 = vmatprep.subr.bf16.mxu0 0
  %873 = vmatpush1.bf16.msra.mxu0 0
  %874 = vmatprep.subr.bf16.mxu0 0
  %875 = vmatpush1.bf16.msra.mxu0 0
  %876 = vmatprep.subr.bf16.mxu0 0
  %877 = vmatpush1.bf16.msra.mxu0 0
  %878 = vmatprep.subr.bf16.mxu0 0
  %879 = vmatpush1.bf16.msra.mxu0 0
  %880 = vmatprep.subr.bf16.mxu0 0
  %881 = vmatpush1.bf16.msra.mxu0 0
  %882 = vmatprep.subr.bf16.mxu0 0
  %883 = vmatpush1.bf16.msra.mxu0 0
  %884 = vmatprep.subr.bf16.mxu0 0
  %885 = vmatpush1.bf16.msra.mxu0 0
  %886 = vmatprep.subr.bf16.mxu0 0
  %887 = vmatpush1.bf16.msra.mxu0 0
  %888 = vmatprep.mubr.bf16.mxu0 0
  %889 = vmatmul.mubr.bf16.gmra.mrb[0].mxu0 %v854
  %v890 = vpop.f32.mrb[0].mxu0
  %v891 = vadd.f32 %v253, %v890
  %v892 = vpop.f32.mrb[0].mxu0
  %v893 = vpop.f32.mrb[0].mxu0
  %v894 = vpop.f32.mrb[0].mxu0
  %895 = vdwg.mxu0
  %v896 = vpack.c.bf16 %v776, %v776
  %898 = vrot.lane.b32.xlu0 %v896, 32
  %v899 = vpop.permute.xlu0 %898
  %v901 = vsel %vm112, %v899, 0
  %903 = vmatprep.subr.bf16.mxu0 0
  %904 = vmatpush1.bf16.msra.mxu0 %v326
  %905 = vmatprep.subr.bf16.mxu0 0
  %906 = vmatpush1.bf16.msra.mxu0 %v327
  %907 = vmatprep.subr.bf16.mxu0 0
  %908 = vmatpush1.bf16.msra.mxu0 0
  %909 = vmatprep.subr.bf16.mxu0 0
  %910 = vmatpush1.bf16.msra.mxu0 0
  %911 = vmatprep.subr.bf16.mxu0 0
  %912 = vmatpush1.bf16.msra.mxu0 0
  %913 = vmatprep.subr.bf16.mxu0 0
  %914 = vmatpush1.bf16.msra.mxu0 0
  %915 = vmatprep.subr.bf16.mxu0 0
  %916 = vmatpush1.bf16.msra.mxu0 0
  %917 = vmatprep.subr.bf16.mxu0 0
  %918 = vmatpush1.bf16.msra.mxu0 0
  %919 = vmatprep.subr.bf16.mxu0 0
  %920 = vmatpush1.bf16.msra.mxu0 0
  %921 = vmatprep.subr.bf16.mxu0 0
  %922 = vmatpush1.bf16.msra.mxu0 0
  %923 = vmatprep.subr.bf16.mxu0 0
  %924 = vmatpush1.bf16.msra.mxu0 0
  %925 = vmatprep.subr.bf16.mxu0 0
  %926 = vmatpush1.bf16.msra.mxu0 0
  %927 = vmatprep.subr.bf16.mxu0 0
  %928 = vmatpush1.bf16.msra.mxu0 0
  %929 = vmatprep.subr.bf16.mxu0 0
  %930 = vmatpush1.bf16.msra.mxu0 0
  %931 = vmatprep.subr.bf16.mxu0 0
  %932 = vmatpush1.bf16.msra.mxu0 0
  %933 = vmatprep.subr.bf16.mxu0 0
  %934 = vmatpush1.bf16.msra.mxu0 0
  %935 = vmatprep.mubr.bf16.mxu0 0
  %936 = vmatmul.mubr.bf16.gmra.mrb[0].mxu0 %v901
  %v937 = vpop.f32.mrb[0].mxu0
  %v938 = vadd.f32 0.0, %v937
  %v939 = vpop.f32.mrb[0].mxu0
  %v940 = vpop.f32.mrb[0].mxu0
  %v941 = vpop.f32.mrb[0].mxu0
  %942 = vdwg.mxu0
  %v943 = vadd.f32 %v891, %v938
  %v944 = vxor.u32 %v943, 2147483648
  %v945 = vmul.f32 %v944, 1.442695
  %v946 = vpow.pop %v945
  %v947 = vadd.f32 %v946, 1.0
  %v948 = vrcp.pop %v947
  %v949 = vmul.f32 1.0, %v948
  %v950 = vtanh.pop %v943
  %v951 = vmul.f32 %v949, %v770
  %953 = vrot.lane.b32.xlu0 %v950, 64
  %v954 = vpop.permute.xlu0 %953
  %v956 = vmul.f32 %v949, %v954
  %958 = vrot.lane.b32.xlu0 %v956, 32
  %v959 = vpop.permute.xlu0 %958
  %v961 = vadd.f32 %v951, %v959
  %v962 = vtanh.pop %v961
  %964 = vrot.lane.b32.xlu0 %v962, 64
  %v965 = vpop.permute.xlu0 %964
  %v967 = vmul.f32 %v949, %v965
  %968 = vmatprep.subr.bf16.mxu0 0
  %969 = vmatpush1.bf16.msra.mxu0 %v169
  %970 = vmatprep.subr.bf16.mxu0 0
  %971 = vmatpush1.bf16.msra.mxu0 %v170
  %972 = vmatprep.subr.bf16.mxu0 0
  %973 = vmatpush1.bf16.msra.mxu0 0
  %974 = vmatprep.subr.bf16.mxu0 0
  %975 = vmatpush1.bf16.msra.mxu0 0
  %976 = vmatprep.subr.bf16.mxu0 0
  %977 = vmatpush1.bf16.msra.mxu0 0
  %978 = vmatprep.subr.bf16.mxu0 0
  %979 = vmatpush1.bf16.msra.mxu0 0
  %980 = vmatprep.subr.bf16.mxu0 0
  %981 = vmatpush1.bf16.msra.mxu0 0
  %982 = vmatprep.subr.bf16.mxu0 0
  %983 = vmatpush1.bf16.msra.mxu0 0
  %984 = vmatprep.subr.bf16.mxu0 0
  %985 = vmatpush1.bf16.msra.mxu0 0
  %986 = vmatprep.subr.bf16.mxu0 0
  %987 = vmatpush1.bf16.msra.mxu0 0
  %988 = vmatprep.subr.bf16.mxu0 0
  %989 = vmatpush1.bf16.msra.mxu0 0
  %990 = vmatprep.subr.bf16.mxu0 0
  %991 = vmatpush1.bf16.msra.mxu0 0
  %992 = vmatprep.subr.bf16.mxu0 0
  %993 = vmatpush1.bf16.msra.mxu0 0
  %994 = vmatprep.subr.bf16.mxu0 0
  %995 = vmatpush1.bf16.msra.mxu0 0
  %996 = vmatprep.subr.bf16.mxu0 0
  %997 = vmatpush1.bf16.msra.mxu0 0
  %998 = vmatprep.subr.bf16.mxu0 0
  %999 = vmatpush1.bf16.msra.mxu0 0
  %1000 = vmatprep.mubr.bf16.mxu0 0
  %1001 = vmatmul.mubr.bf16.gmra.mrb[0].mxu0 %v854
  %v1002 = vpop.f32.mrb[0].mxu0
  %v1003 = vadd.f32 0.0, %v1002
  %v1004 = vpop.f32.mrb[0].mxu0
  %v1005 = vpop.f32.mrb[0].mxu0
  %v1006 = vpop.f32.mrb[0].mxu0
  %1007 = vdwg.mxu0
  %v1008 = vadd.f32 %v154, %v1003
  %v1009 = vxor.u32 %v1008, 2147483648
  %v1010 = vmul.f32 %v1009, 1.442695
  %v1011 = vpow.pop %v1010
  %v1012 = vadd.f32 %v1011, 1.0
  %v1013 = vrcp.pop %v1012
  %v1014 = vmul.f32 1.0, %v1013
  %v1015 = vtanh.pop %v1008
  %v1017 = vrot.slane %v841, 6
  %v1019 = vmul.f32 %v1014, %v1017
  %1021 = vrot.lane.b32.xlu0 %v1015, 64
  %v1022 = vpop.permute.xlu0 %1021
  %v1024 = vmul.f32 %v1014, %v1022
  %1026 = vrot.lane.b32.xlu0 %v1024, 32
  %v1027 = vpop.permute.xlu0 %1026
  %v1029 = vadd.f32 %v1019, %v1027
  %v1030 = vtanh.pop %v1029
  %1032 = vrot.lane.b32.xlu0 %v1030, 64
  %v1033 = vpop.permute.xlu0 %1032
  %v1035 = vmul.f32 %v1014, %v1033
  %v1036 = vpack.c.bf16 %v1035, %v1035
  %1038 = vrot.lane.b32.xlu0 %v1036, 32
  %v1039 = vpop.permute.xlu0 %1038
  %v1041 = vsel %vm112, %v1039, 0
  %1043 = vmatprep.subr.bf16.mxu0 0
  %1044 = vmatpush1.bf16.msra.mxu0 %v266
  %1045 = vmatprep.subr.bf16.mxu0 0
  %1046 = vmatpush1.bf16.msra.mxu0 %v267
  %1047 = vmatprep.subr.bf16.mxu0 0
  %1048 = vmatpush1.bf16.msra.mxu0 0
  %1049 = vmatprep.subr.bf16.mxu0 0
  %1050 = vmatpush1.bf16.msra.mxu0 0
  %1051 = vmatprep.subr.bf16.mxu0 0
  %1052 = vmatpush1.bf16.msra.mxu0 0
  %1053 = vmatprep.subr.bf16.mxu0 0
  %1054 = vmatpush1.bf16.msra.mxu0 0
  %1055 = vmatprep.subr.bf16.mxu0 0
  %1056 = vmatpush1.bf16.msra.mxu0 0
  %1057 = vmatprep.subr.bf16.mxu0 0
  %1058 = vmatpush1.bf16.msra.mxu0 0
  %1059 = vmatprep.subr.bf16.mxu0 0
  %1060 = vmatpush1.bf16.msra.mxu0 0
  %1061 = vmatprep.subr.bf16.mxu0 0
  %1062 = vmatpush1.bf16.msra.mxu0 0
  %1063 = vmatprep.subr.bf16.mxu0 0
  %1064 = vmatpush1.bf16.msra.mxu0 0
  %1065 = vmatprep.subr.bf16.mxu0 0
  %1066 = vmatpush1.bf16.msra.mxu0 0
  %1067 = vmatprep.subr.bf16.mxu0 0
  %1068 = vmatpush1.bf16.msra.mxu0 0
  %1069 = vmatprep.subr.bf16.mxu0 0
  %1070 = vmatpush1.bf16.msra.mxu0 0
  %1071 = vmatprep.subr.bf16.mxu0 0
  %1072 = vmatpush1.bf16.msra.mxu0 0
  %1073 = vmatprep.subr.bf16.mxu0 0
  %1074 = vmatpush1.bf16.msra.mxu0 0
  %1075 = vmatprep.mubr.bf16.mxu0 0
  %1076 = vmatmul.mubr.bf16.gmra.mrb[0].mxu0 %v1041
  %v1077 = vpop.f32.mrb[0].mxu0
  %v1078 = vadd.f32 %v253, %v1077
  %v1079 = vpop.f32.mrb[0].mxu0
  %v1080 = vpop.f32.mrb[0].mxu0
  %v1081 = vpop.f32.mrb[0].mxu0
  %1082 = vdwg.mxu0
  %v1083 = vpack.c.bf16 %v967, %v967
  %1085 = vrot.lane.b32.xlu0 %v1083, 32
  %v1086 = vpop.permute.xlu0 %1085
  %v1088 = vsel %vm112, %v1086, 0
  %1090 = vmatprep.subr.bf16.mxu0 0
  %1091 = vmatpush1.bf16.msra.mxu0 %v326
  %1092 = vmatprep.subr.bf16.mxu0 0
  %1093 = vmatpush1.bf16.msra.mxu0 %v327
  %1094 = vmatprep.subr.bf16.mxu0 0
  %1095 = vmatpush1.bf16.msra.mxu0 0
  %1096 = vmatprep.subr.bf16.mxu0 0
  %1097 = vmatpush1.bf16.msra.mxu0 0
  %1098 = vmatprep.subr.bf16.mxu0 0
  %1099 = vmatpush1.bf16.msra.mxu0 0
  %1100 = vmatprep.subr.bf16.mxu0 0
  %1101 = vmatpush1.bf16.msra.mxu0 0
  %1102 = vmatprep.subr.bf16.mxu0 0
  %1103 = vmatpush1.bf16.msra.mxu0 0
  %1104 = vmatprep.subr.bf16.mxu0 0
  %1105 = vmatpush1.bf16.msra.mxu0 0
  %1106 = vmatprep.subr.bf16.mxu0 0
  %1107 = vmatpush1.bf16.msra.mxu0 0
  %1108 = vmatprep.subr.bf16.mxu0 0
  %1109 = vmatpush1.bf16.msra.mxu0 0
  %1110 = vmatprep.subr.bf16.mxu0 0
  %1111 = vmatpush1.bf16.msra.mxu0 0
  %1112 = vmatprep.subr.bf16.mxu0 0
  %1113 = vmatpush1.bf16.msra.mxu0 0
  %1114 = vmatprep.subr.bf16.mxu0 0
  %1115 = vmatpush1.bf16.msra.mxu0 0
  %1116 = vmatprep.subr.bf16.mxu0 0
  %1117 = vmatpush1.bf16.msra.mxu0 0
  %1118 = vmatprep.subr.bf16.mxu0 0
  %1119 = vmatpush1.bf16.msra.mxu0 0
  %1120 = vmatprep.subr.bf16.mxu0 0
  %1121 = vmatpush1.bf16.msra.mxu0 0
  %1122 = vmatprep.mubr.bf16.mxu0 0
  %1123 = vmatmul.mubr.bf16.gmra.mrb[0].mxu0 %v1088
  %v1124 = vpop.f32.mrb[0].mxu0
  %v1125 = vadd.f32 0.0, %v1124
  %v1126 = vpop.f32.mrb[0].mxu0
  %v1127 = vpop.f32.mrb[0].mxu0
  %v1128 = vpop.f32.mrb[0].mxu0
  %1129 = vdwg.mxu0
  %v1130 = vadd.f32 %v1078, %v1125
  %v1131 = vxor.u32 %v1130, 2147483648
  %v1132 = vmul.f32 %v1131, 1.442695
  %v1133 = vpow.pop %v1132
  %v1134 = vadd.f32 %v1133, 1.0
  %v1135 = vrcp.pop %v1134
  %v1136 = vmul.f32 1.0, %v1135
  %v1137 = vtanh.pop %v1130
  %v1138 = vmul.f32 %v1136, %v961
  %1140 = vrot.lane.b32.xlu0 %v1137, 64
  %v1141 = vpop.permute.xlu0 %1140
  %v1143 = vmul.f32 %v1136, %v1141
  %1145 = vrot.lane.b32.xlu0 %v1143, 32
  %v1146 = vpop.permute.xlu0 %1145
  %v1148 = vadd.f32 %v1138, %v1146
  %v1149 = vtanh.pop %v1148
  %1151 = vrot.lane.b32.xlu0 %v1149, 64
  %v1152 = vpop.permute.xlu0 %1151
  %v1154 = vmul.f32 %v1136, %v1152
  %1155 = vmatprep.subr.bf16.mxu0 0
  %1156 = vmatpush1.bf16.msra.mxu0 %v169
  %1157 = vmatprep.subr.bf16.mxu0 0
  %1158 = vmatpush1.bf16.msra.mxu0 %v170
  %1159 = vmatprep.subr.bf16.mxu0 0
  %1160 = vmatpush1.bf16.msra.mxu0 0
  %1161 = vmatprep.subr.bf16.mxu0 0
  %1162 = vmatpush1.bf16.msra.mxu0 0
  %1163 = vmatprep.subr.bf16.mxu0 0
  %1164 = vmatpush1.bf16.msra.mxu0 0
  %1165 = vmatprep.subr.bf16.mxu0 0
  %1166 = vmatpush1.bf16.msra.mxu0 0
  %1167 = vmatprep.subr.bf16.mxu0 0
  %1168 = vmatpush1.bf16.msra.mxu0 0
  %1169 = vmatprep.subr.bf16.mxu0 0
  %1170 = vmatpush1.bf16.msra.mxu0 0
  %1171 = vmatprep.subr.bf16.mxu0 0
  %1172 = vmatpush1.bf16.msra.mxu0 0
  %1173 = vmatprep.subr.bf16.mxu0 0
  %1174 = vmatpush1.bf16.msra.mxu0 0
  %1175 = vmatprep.subr.bf16.mxu0 0
  %1176 = vmatpush1.bf16.msra.mxu0 0
  %1177 = vmatprep.subr.bf16.mxu0 0
  %1178 = vmatpush1.bf16.msra.mxu0 0
  %1179 = vmatprep.subr.bf16.mxu0 0
  %1180 = vmatpush1.bf16.msra.mxu0 0
  %1181 = vmatprep.subr.bf16.mxu0 0
  %1182 = vmatpush1.bf16.msra.mxu0 0
  %1183 = vmatprep.subr.bf16.mxu0 0
  %1184 = vmatpush1.bf16.msra.mxu0 0
  %1185 = vmatprep.subr.bf16.mxu0 0
  %1186 = vmatpush1.bf16.msra.mxu0 0
  %1187 = vmatprep.mubr.bf16.mxu0 0
  %1188 = vmatmul.mubr.bf16.gmra.mrb[0].mxu0 %v1041
  %v1189 = vpop.f32.mrb[0].mxu0
  %v1190 = vadd.f32 0.0, %v1189
  %v1191 = vpop.f32.mrb[0].mxu0
  %v1192 = vpop.f32.mrb[0].mxu0
  %v1193 = vpop.f32.mrb[0].mxu0
  %1194 = vdwg.mxu0
  %v1196 = vrot.slane %v1190, 6
  %v1198 = vadd.f32 %v154, %v1196
  %v1199 = vxor.u32 %v1198, 2147483648
  %v1200 = vmul.f32 %v1199, 1.442695
  %v1201 = vpow.pop %v1200
  %v1202 = vadd.f32 %v1201, 1.0
  %v1203 = vrcp.pop %v1202
  %v1204 = vmul.f32 1.0, %v1203
  %v1205 = vtanh.pop %v1198
  %v1207 = vrot.slane %v1029, 6
  %v1209 = vmul.f32 %v1204, %v1207
  %1211 = vrot.lane.b32.xlu0 %v1205, 64
  %v1212 = vpop.permute.xlu0 %1211
  %v1214 = vmul.f32 %v1204, %v1212
  %1216 = vrot.lane.b32.xlu0 %v1214, 32
  %v1217 = vpop.permute.xlu0 %1216
  %v1219 = vadd.f32 %v1209, %v1217
  %v1220 = vtanh.pop %v1219
  %1222 = vrot.lane.b32.xlu0 %v1220, 64
  %v1223 = vpop.permute.xlu0 %1222
  %v1225 = vmul.f32 %v1204, %v1223
  %v1226 = vpack.c.bf16 %v1225, %v1225
  %v1228 = vrot.slane %v1226, 1
  %1229 = vrot.lane.b32.xlu0 %v1228, 32
  %v1230 = vpop.permute.xlu0 %1229
  %v1232 = vsel %vm112, %v1230, 0
  %1234 = vmatprep.subr.bf16.mxu0 0
  %1235 = vmatpush1.bf16.msra.mxu0 %v266
  %1236 = vmatprep.subr.bf16.mxu0 0
  %1237 = vmatpush1.bf16.msra.mxu0 %v267
  %1238 = vmatprep.subr.bf16.mxu0 0
  %1239 = vmatpush1.bf16.msra.mxu0 0
  %1240 = vmatprep.subr.bf16.mxu0 0
  %1241 = vmatpush1.bf16.msra.mxu0 0
  %1242 = vmatprep.subr.bf16.mxu0 0
  %1243 = vmatpush1.bf16.msra.mxu0 0
  %1244 = vmatprep.subr.bf16.mxu0 0
  %1245 = vmatpush1.bf16.msra.mxu0 0
  %1246 = vmatprep.subr.bf16.mxu0 0
  %1247 = vmatpush1.bf16.msra.mxu0 0
  %1248 = vmatprep.subr.bf16.mxu0 0
  %1249 = vmatpush1.bf16.msra.mxu0 0
  %1250 = vmatprep.subr.bf16.mxu0 0
  %1251 = vmatpush1.bf16.msra.mxu0 0
  %1252 = vmatprep.subr.bf16.mxu0 0
  %1253 = vmatpush1.bf16.msra.mxu0 0
  %1254 = vmatprep.subr.bf16.mxu0 0
  %1255 = vmatpush1.bf16.msra.mxu0 0
  %1256 = vmatprep.subr.bf16.mxu0 0
  %1257 = vmatpush1.bf16.msra.mxu0 0
  %1258 = vmatprep.subr.bf16.mxu0 0
  %1259 = vmatpush1.bf16.msra.mxu0 0
  %1260 = vmatprep.subr.bf16.mxu0 0
  %1261 = vmatpush1.bf16.msra.mxu0 0
  %1262 = vmatprep.subr.bf16.mxu0 0
  %1263 = vmatpush1.bf16.msra.mxu0 0
  %1264 = vmatprep.subr.bf16.mxu0 0
  %1265 = vmatpush1.bf16.msra.mxu0 0
  %1266 = vmatprep.mubr.bf16.mxu0 0
  %1267 = vmatmul.mubr.bf16.gmra.mrb[0].mxu0 %v1232
  %v1268 = vpop.f32.mrb[0].mxu0
  %v1269 = vadd.f32 %v253, %v1268
  %v1270 = vpop.f32.mrb[0].mxu0
  %v1271 = vpop.f32.mrb[0].mxu0
  %v1272 = vpop.f32.mrb[0].mxu0
  %1273 = vdwg.mxu0
  %v1274 = vpack.c.bf16 %v1154, %v1154
  %1276 = vrot.lane.b32.xlu0 %v1274, 32
  %v1277 = vpop.permute.xlu0 %1276
  %v1279 = vsel %vm112, %v1277, 0
  %1281 = vmatprep.subr.bf16.mxu0 0
  %1282 = vmatpush1.bf16.msra.mxu0 %v326
  %1283 = vmatprep.subr.bf16.mxu0 0
  %1284 = vmatpush1.bf16.msra.mxu0 %v327
  %1285 = vmatprep.subr.bf16.mxu0 0
  %1286 = vmatpush1.bf16.msra.mxu0 0
  %1287 = vmatprep.subr.bf16.mxu0 0
  %1288 = vmatpush1.bf16.msra.mxu0 0
  %1289 = vmatprep.subr.bf16.mxu0 0
  %1290 = vmatpush1.bf16.msra.mxu0 0
  %1291 = vmatprep.subr.bf16.mxu0 0
  %1292 = vmatpush1.bf16.msra.mxu0 0
  %1293 = vmatprep.subr.bf16.mxu0 0
  %1294 = vmatpush1.bf16.msra.mxu0 0
  %1295 = vmatprep.subr.bf16.mxu0 0
  %1296 = vmatpush1.bf16.msra.mxu0 0
  %1297 = vmatprep.subr.bf16.mxu0 0
  %1298 = vmatpush1.bf16.msra.mxu0 0
  %1299 = vmatprep.subr.bf16.mxu0 0
  %1300 = vmatpush1.bf16.msra.mxu0 0
  %1301 = vmatprep.subr.bf16.mxu0 0
  %1302 = vmatpush1.bf16.msra.mxu0 0
  %1303 = vmatprep.subr.bf16.mxu0 0
  %1304 = vmatpush1.bf16.msra.mxu0 0
  %1305 = vmatprep.subr.bf16.mxu0 0
  %1306 = vmatpush1.bf16.msra.mxu0 0
  %1307 = vmatprep.subr.bf16.mxu0 0
  %1308 = vmatpush1.bf16.msra.mxu0 0
  %1309 = vmatprep.subr.bf16.mxu0 0
  %1310 = vmatpush1.bf16.msra.mxu0 0
  %1311 = vmatprep.subr.bf16.mxu0 0
  %1312 = vmatpush1.bf16.msra.mxu0 0
  %1313 = vmatprep.mubr.bf16.mxu0 0
  %1314 = vmatmul.mubr.bf16.gmra.mrb[0].mxu0 %v1279
  %v1315 = vpop.f32.mrb[0].mxu0
  %v1316 = vadd.f32 0.0, %v1315
  %v1317 = vpop.f32.mrb[0].mxu0
  %v1318 = vpop.f32.mrb[0].mxu0
  %v1319 = vpop.f32.mrb[0].mxu0
  %1320 = vdwg.mxu0
  %v1321 = vadd.f32 %v1269, %v1316
  %v1322 = vxor.u32 %v1321, 2147483648
  %v1323 = vmul.f32 %v1322, 1.442695
  %v1324 = vpow.pop %v1323
  %v1325 = vadd.f32 %v1324, 1.0
  %v1326 = vrcp.pop %v1325
  %v1327 = vmul.f32 1.0, %v1326
  %v1328 = vtanh.pop %v1321
  %v1329 = vmul.f32 %v1327, %v1148
  %1331 = vrot.lane.b32.xlu0 %v1328, 64
  %v1332 = vpop.permute.xlu0 %1331
  %v1334 = vmul.f32 %v1327, %v1332
  %1336 = vrot.lane.b32.xlu0 %v1334, 32
  %v1337 = vpop.permute.xlu0 %1336
  %v1339 = vadd.f32 %v1329, %v1337
  %v1340 = vtanh.pop %v1339
  %1342 = vrot.lane.b32.xlu0 %v1340, 64
  %v1343 = vpop.permute.xlu0 %1342
  %v1345 = vmul.f32 %v1327, %v1343
  %1346 = vmatprep.subr.bf16.mxu0 0
  %1347 = vmatpush1.bf16.msra.mxu0 %v169
  %1348 = vmatprep.subr.bf16.mxu0 0
  %1349 = vmatpush1.bf16.msra.mxu0 %v170
  %1350 = vmatprep.subr.bf16.mxu0 0
  %1351 = vmatpush1.bf16.msra.mxu0 0
  %1352 = vmatprep.subr.bf16.mxu0 0
  %1353 = vmatpush1.bf16.msra.mxu0 0
  %1354 = vmatprep.subr.bf16.mxu0 0
  %1355 = vmatpush1.bf16.msra.mxu0 0
  %1356 = vmatprep.subr.bf16.mxu0 0
  %1357 = vmatpush1.bf16.msra.mxu0 0
  %1358 = vmatprep.subr.bf16.mxu0 0
  %1359 = vmatpush1.bf16.msra.mxu0 0
  %1360 = vmatprep.subr.bf16.mxu0 0
  %1361 = vmatpush1.bf16.msra.mxu0 0
  %1362 = vmatprep.subr.bf16.mxu0 0
  %1363 = vmatpush1.bf16.msra.mxu0 0
  %1364 = vmatprep.subr.bf16.mxu0 0
  %1365 = vmatpush1.bf16.msra.mxu0 0
  %1366 = vmatprep.subr.bf16.mxu0 0
  %1367 = vmatpush1.bf16.msra.mxu0 0
  %1368 = vmatprep.subr.bf16.mxu0 0
  %1369 = vmatpush1.bf16.msra.mxu0 0
  %1370 = vmatprep.subr.bf16.mxu0 0
  %1371 = vmatpush1.bf16.msra.mxu0 0
  %1372 = vmatprep.subr.bf16.mxu0 0
  %1373 = vmatpush1.bf16.msra.mxu0 0
  %1374 = vmatprep.subr.bf16.mxu0 0
  %1375 = vmatpush1.bf16.msra.mxu0 0
  %1376 = vmatprep.subr.bf16.mxu0 0
  %1377 = vmatpush1.bf16.msra.mxu0 0
  %1378 = vmatprep.mubr.bf16.mxu0 0
  %1379 = vmatmul.mubr.bf16.gmra.mrb[0].mxu0 %v1232
  %v1380 = vpop.f32.mrb[0].mxu0
  %v1381 = vadd.f32 0.0, %v1380
  %v1382 = vpop.f32.mrb[0].mxu0
  %v1383 = vpop.f32.mrb[0].mxu0
  %v1384 = vpop.f32.mrb[0].mxu0
  %1385 = vdwg.mxu0
  %v1387 = vrot.slane %v1381, 4
  %v1389 = vadd.f32 %v154, %v1387
  %v1390 = vxor.u32 %v1389, 2147483648
  %v1391 = vmul.f32 %v1390, 1.442695
  %v1392 = vpow.pop %v1391
  %v1393 = vadd.f32 %v1392, 1.0
  %v1394 = vrcp.pop %v1393
  %v1395 = vmul.f32 1.0, %v1394
  %v1396 = vtanh.pop %v1389
  %v1398 = vrot.slane %v1219, 6
  %v1400 = vmul.f32 %v1395, %v1398
  %1402 = vrot.lane.b32.xlu0 %v1396, 64
  %v1403 = vpop.permute.xlu0 %1402
  %v1405 = vmul.f32 %v1395, %v1403
  %1407 = vrot.lane.b32.xlu0 %v1405, 32
  %v1408 = vpop.permute.xlu0 %1407
  %v1410 = vadd.f32 %v1400, %v1408
  %v1411 = vtanh.pop %v1410
  %1413 = vrot.lane.b32.xlu0 %v1411, 64
  %v1414 = vpop.permute.xlu0 %1413
  %v1416 = vmul.f32 %v1395, %v1414
  %v1417 = vpack.c.bf16 %v1416, %v1416
  %v1419 = vrot.slane %v1417, 2
  %1420 = vrot.lane.b32.xlu0 %v1419, 32
  %v1421 = vpop.permute.xlu0 %1420
  %v1423 = vsel %vm112, %v1421, 0
  %1425 = vmatprep.subr.bf16.mxu0 0
  %1426 = vmatpush1.bf16.msra.mxu0 %v266
  %1427 = vmatprep.subr.bf16.mxu0 0
  %1428 = vmatpush1.bf16.msra.mxu0 %v267
  %1429 = vmatprep.subr.bf16.mxu0 0
  %1430 = vmatpush1.bf16.msra.mxu0 0
  %1431 = vmatprep.subr.bf16.mxu0 0
  %1432 = vmatpush1.bf16.msra.mxu0 0
  %1433 = vmatprep.subr.bf16.mxu0 0
  %1434 = vmatpush1.bf16.msra.mxu0 0
  %1435 = vmatprep.subr.bf16.mxu0 0
  %1436 = vmatpush1.bf16.msra.mxu0 0
  %1437 = vmatprep.subr.bf16.mxu0 0
  %1438 = vmatpush1.bf16.msra.mxu0 0
  %1439 = vmatprep.subr.bf16.mxu0 0
  %1440 = vmatpush1.bf16.msra.mxu0 0
  %1441 = vmatprep.subr.bf16.mxu0 0
  %1442 = vmatpush1.bf16.msra.mxu0 0
  %1443 = vmatprep.subr.bf16.mxu0 0
  %1444 = vmatpush1.bf16.msra.mxu0 0
  %1445 = vmatprep.subr.bf16.mxu0 0
  %1446 = vmatpush1.bf16.msra.mxu0 0
  %1447 = vmatprep.subr.bf16.mxu0 0
  %1448 = vmatpush1.bf16.msra.mxu0 0
  %1449 = vmatprep.subr.bf16.mxu0 0
  %1450 = vmatpush1.bf16.msra.mxu0 0
  %1451 = vmatprep.subr.bf16.mxu0 0
  %1452 = vmatpush1.bf16.msra.mxu0 0
  %1453 = vmatprep.subr.bf16.mxu0 0
  %1454 = vmatpush1.bf16.msra.mxu0 0
  %1455 = vmatprep.subr.bf16.mxu0 0
  %1456 = vmatpush1.bf16.msra.mxu0 0
  %1457 = vmatprep.mubr.bf16.mxu0 0
  %1458 = vmatmul.mubr.bf16.gmra.mrb[0].mxu0 %v1423
  %v1459 = vpop.f32.mrb[0].mxu0
  %v1460 = vadd.f32 %v253, %v1459
  %v1461 = vpop.f32.mrb[0].mxu0
  %v1462 = vpop.f32.mrb[0].mxu0
  %v1463 = vpop.f32.mrb[0].mxu0
  %1464 = vdwg.mxu0
  %v1465 = vpack.c.bf16 %v1345, %v1345
  %1467 = vrot.lane.b32.xlu0 %v1465, 32
  %v1468 = vpop.permute.xlu0 %1467
  %v1470 = vsel %vm112, %v1468, 0
  %1472 = vmatprep.subr.bf16.mxu0 0
  %1473 = vmatpush1.bf16.msra.mxu0 %v326
  %1474 = vmatprep.subr.bf16.mxu0 0
  %1475 = vmatpush1.bf16.msra.mxu0 %v327
  %1476 = vmatprep.subr.bf16.mxu0 0
  %1477 = vmatpush1.bf16.msra.mxu0 0
  %1478 = vmatprep.subr.bf16.mxu0 0
  %1479 = vmatpush1.bf16.msra.mxu0 0
  %1480 = vmatprep.subr.bf16.mxu0 0
  %1481 = vmatpush1.bf16.msra.mxu0 0
  %1482 = vmatprep.subr.bf16.mxu0 0
  %1483 = vmatpush1.bf16.msra.mxu0 0
  %1484 = vmatprep.subr.bf16.mxu0 0
  %1485 = vmatpush1.bf16.msra.mxu0 0
  %1486 = vmatprep.subr.bf16.mxu0 0
  %1487 = vmatpush1.bf16.msra.mxu0 0
  %1488 = vmatprep.subr.bf16.mxu0 0
  %1489 = vmatpush1.bf16.msra.mxu0 0
  %1490 = vmatprep.subr.bf16.mxu0 0
  %1491 = vmatpush1.bf16.msra.mxu0 0
  %1492 = vmatprep.subr.bf16.mxu0 0
  %1493 = vmatpush1.bf16.msra.mxu0 0
  %1494 = vmatprep.subr.bf16.mxu0 0
  %1495 = vmatpush1.bf16.msra.mxu0 0
  %1496 = vmatprep.subr.bf16.mxu0 0
  %1497 = vmatpush1.bf16.msra.mxu0 0
  %1498 = vmatprep.subr.bf16.mxu0 0
  %1499 = vmatpush1.bf16.msra.mxu0 0
  %1500 = vmatprep.subr.bf16.mxu0 0
  %1501 = vmatpush1.bf16.msra.mxu0 0
  %1502 = vmatprep.subr.bf16.mxu0 0
  %1503 = vmatpush1.bf16.msra.mxu0 0
  %1504 = vmatprep.mubr.bf16.mxu0 0
  %1505 = vmatmul.mubr.bf16.gmra.mrb[0].mxu0 %v1470
  %v1506 = vpop.f32.mrb[0].mxu0
  %v1507 = vadd.f32 0.0, %v1506
  %v1508 = vpop.f32.mrb[0].mxu0
  %v1509 = vpop.f32.mrb[0].mxu0
  %v1510 = vpop.f32.mrb[0].mxu0
  %1511 = vdwg.mxu0
  %v1512 = vadd.f32 %v1460, %v1507
  %v1513 = vxor.u32 %v1512, 2147483648
  %v1514 = vmul.f32 %v1513, 1.442695
  %v1515 = vpow.pop %v1514
  %v1516 = vadd.f32 %v1515, 1.0
  %v1517 = vrcp.pop %v1516
  %v1518 = vmul.f32 1.0, %v1517
  %v1519 = vtanh.pop %v1512
  %v1520 = vmul.f32 %v1518, %v1339
  %1522 = vrot.lane.b32.xlu0 %v1519, 64
  %v1523 = vpop.permute.xlu0 %1522
  %v1525 = vmul.f32 %v1518, %v1523
  %1527 = vrot.lane.b32.xlu0 %v1525, 32
  %v1528 = vpop.permute.xlu0 %1527
  %v1530 = vadd.f32 %v1520, %v1528
  %v1531 = vtanh.pop %v1530
  %1533 = vrot.lane.b32.xlu0 %v1531, 64
  %v1534 = vpop.permute.xlu0 %1533
  %v1536 = vmul.f32 %v1518, %v1534
  %1537 = vmatprep.subr.bf16.mxu0 0
  %1538 = vmatpush1.bf16.msra.mxu0 %v169
  %1539 = vmatprep.subr.bf16.mxu0 0
  %1540 = vmatpush1.bf16.msra.mxu0 %v170
  %1541 = vmatprep.subr.bf16.mxu0 0
  %1542 = vmatpush1.bf16.msra.mxu0 0
  %1543 = vmatprep.subr.bf16.mxu0 0
  %1544 = vmatpush1.bf16.msra.mxu0 0
  %1545 = vmatprep.subr.bf16.mxu0 0
  %1546 = vmatpush1.bf16.msra.mxu0 0
  %1547 = vmatprep.subr.bf16.mxu0 0
  %1548 = vmatpush1.bf16.msra.mxu0 0
  %1549 = vmatprep.subr.bf16.mxu0 0
  %1550 = vmatpush1.bf16.msra.mxu0 0
  %1551 = vmatprep.subr.bf16.mxu0 0
  %1552 = vmatpush1.bf16.msra.mxu0 0
  %1553 = vmatprep.subr.bf16.mxu0 0
  %1554 = vmatpush1.bf16.msra.mxu0 0
  %1555 = vmatprep.subr.bf16.mxu0 0
  %1556 = vmatpush1.bf16.msra.mxu0 0
  %1557 = vmatprep.subr.bf16.mxu0 0
  %1558 = vmatpush1.bf16.msra.mxu0 0
  %1559 = vmatprep.subr.bf16.mxu0 0
  %1560 = vmatpush1.bf16.msra.mxu0 0
  %1561 = vmatprep.subr.bf16.mxu0 0
  %1562 = vmatpush1.bf16.msra.mxu0 0
  %1563 = vmatprep.subr.bf16.mxu0 0
  %1564 = vmatpush1.bf16.msra.mxu0 0
  %1565 = vmatprep.subr.bf16.mxu0 0
  %1566 = vmatpush1.bf16.msra.mxu0 0
  %1567 = vmatprep.subr.bf16.mxu0 0
  %1568 = vmatpush1.bf16.msra.mxu0 0
  %1569 = vmatprep.mubr.bf16.mxu0 0
  %1570 = vmatmul.mubr.bf16.gmra.mrb[0].mxu0 %v1423
  %v1571 = vpop.f32.mrb[0].mxu0
  %v1572 = vadd.f32 0.0, %v1571
  %v1573 = vpop.f32.mrb[0].mxu0
  %v1574 = vpop.f32.mrb[0].mxu0
  %v1575 = vpop.f32.mrb[0].mxu0
  %1576 = vdwg.mxu0
  %v1578 = vrot.slane %v1572, 2
  %v1580 = vadd.f32 %v154, %v1578
  %v1581 = vxor.u32 %v1580, 2147483648
  %v1582 = vmul.f32 %v1581, 1.442695
  %v1583 = vpow.pop %v1582
  %v1584 = vadd.f32 %v1583, 1.0
  %v1585 = vrcp.pop %v1584
  %v1586 = vmul.f32 1.0, %v1585
  %v1587 = vtanh.pop %v1580
  %v1589 = vrot.slane %v1410, 6
  %v1591 = vmul.f32 %v1586, %v1589
  %1593 = vrot.lane.b32.xlu0 %v1587, 64
  %v1594 = vpop.permute.xlu0 %1593
  %v1596 = vmul.f32 %v1586, %v1594
  %1598 = vrot.lane.b32.xlu0 %v1596, 32
  %v1599 = vpop.permute.xlu0 %1598
  %v1601 = vadd.f32 %v1591, %v1599
  %v1602 = vtanh.pop %v1601
  %1604 = vrot.lane.b32.xlu0 %v1602, 64
  %v1605 = vpop.permute.xlu0 %1604
  %v1607 = vmul.f32 %v1586, %v1605
  %v1608 = vpack.c.bf16 %v1607, %v1607
  %v1610 = vrot.slane %v1608, 3
  %1611 = vrot.lane.b32.xlu0 %v1610, 32
  %v1612 = vpop.permute.xlu0 %1611
  %v1614 = vsel %vm112, %v1612, 0
  %1616 = vmatprep.subr.bf16.mxu0 0
  %1617 = vmatpush1.bf16.msra.mxu0 %v266
  %1618 = vmatprep.subr.bf16.mxu0 0
  %1619 = vmatpush1.bf16.msra.mxu0 %v267
  %1620 = vmatprep.subr.bf16.mxu0 0
  %1621 = vmatpush1.bf16.msra.mxu0 0
  %1622 = vmatprep.subr.bf16.mxu0 0
  %1623 = vmatpush1.bf16.msra.mxu0 0
  %1624 = vmatprep.subr.bf16.mxu0 0
  %1625 = vmatpush1.bf16.msra.mxu0 0
  %1626 = vmatprep.subr.bf16.mxu0 0
  %1627 = vmatpush1.bf16.msra.mxu0 0
  %1628 = vmatprep.subr.bf16.mxu0 0
  %1629 = vmatpush1.bf16.msra.mxu0 0
  %1630 = vmatprep.subr.bf16.mxu0 0
  %1631 = vmatpush1.bf16.msra.mxu0 0
  %1632 = vmatprep.subr.bf16.mxu0 0
  %1633 = vmatpush1.bf16.msra.mxu0 0
  %1634 = vmatprep.subr.bf16.mxu0 0
  %1635 = vmatpush1.bf16.msra.mxu0 0
  %1636 = vmatprep.subr.bf16.mxu0 0
  %1637 = vmatpush1.bf16.msra.mxu0 0
  %1638 = vmatprep.subr.bf16.mxu0 0
  %1639 = vmatpush1.bf16.msra.mxu0 0
  %1640 = vmatprep.subr.bf16.mxu0 0
  %1641 = vmatpush1.bf16.msra.mxu0 0
  %1642 = vmatprep.subr.bf16.mxu0 0
  %1643 = vmatpush1.bf16.msra.mxu0 0
  %1644 = vmatprep.subr.bf16.mxu0 0
  %1645 = vmatpush1.bf16.msra.mxu0 0
  %1646 = vmatprep.subr.bf16.mxu0 0
  %1647 = vmatpush1.bf16.msra.mxu0 0
  %1648 = vmatprep.mubr.bf16.mxu0 0
  %1649 = vmatmul.mubr.bf16.gmra.mrb[0].mxu0 %v1614
  %v1650 = vpop.f32.mrb[0].mxu0
  %v1651 = vadd.f32 %v253, %v1650
  %v1652 = vpop.f32.mrb[0].mxu0
  %v1653 = vpop.f32.mrb[0].mxu0
  %v1654 = vpop.f32.mrb[0].mxu0
  %1655 = vdwg.mxu0
  %v1656 = vpack.c.bf16 %v1536, %v1536
  %1658 = vrot.lane.b32.xlu0 %v1656, 32
  %v1659 = vpop.permute.xlu0 %1658
  %v1661 = vsel %vm112, %v1659, 0
  %1663 = vmatprep.subr.bf16.mxu0 0
  %1664 = vmatpush1.bf16.msra.mxu0 %v326
  %1665 = vmatprep.subr.bf16.mxu0 0
  %1666 = vmatpush1.bf16.msra.mxu0 %v327
  %1667 = vmatprep.subr.bf16.mxu0 0
  %1668 = vmatpush1.bf16.msra.mxu0 0
  %1669 = vmatprep.subr.bf16.mxu0 0
  %1670 = vmatpush1.bf16.msra.mxu0 0
  %1671 = vmatprep.subr.bf16.mxu0 0
  %1672 = vmatpush1.bf16.msra.mxu0 0
  %1673 = vmatprep.subr.bf16.mxu0 0
  %1674 = vmatpush1.bf16.msra.mxu0 0
  %1675 = vmatprep.subr.bf16.mxu0 0
  %1676 = vmatpush1.bf16.msra.mxu0 0
  %1677 = vmatprep.subr.bf16.mxu0 0
  %1678 = vmatpush1.bf16.msra.mxu0 0
  %1679 = vmatprep.subr.bf16.mxu0 0
  %1680 = vmatpush1.bf16.msra.mxu0 0
  %1681 = vmatprep.subr.bf16.mxu0 0
  %1682 = vmatpush1.bf16.msra.mxu0 0
  %1683 = vmatprep.subr.bf16.mxu0 0
  %1684 = vmatpush1.bf16.msra.mxu0 0
  %1685 = vmatprep.subr.bf16.mxu0 0
  %1686 = vmatpush1.bf16.msra.mxu0 0
  %1687 = vmatprep.subr.bf16.mxu0 0
  %1688 = vmatpush1.bf16.msra.mxu0 0
  %1689 = vmatprep.subr.bf16.mxu0 0
  %1690 = vmatpush1.bf16.msra.mxu0 0
  %1691 = vmatprep.subr.bf16.mxu0 0
  %1692 = vmatpush1.bf16.msra.mxu0 0
  %1693 = vmatprep.subr.bf16.mxu0 0
  %1694 = vmatpush1.bf16.msra.mxu0 0
  %1695 = vmatprep.mubr.bf16.mxu0 0
  %1696 = vmatmul.mubr.bf16.gmra.mrb[0].mxu0 %v1661
  %v1697 = vpop.f32.mrb[0].mxu0
  %v1698 = vadd.f32 0.0, %v1697
  %v1699 = vpop.f32.mrb[0].mxu0
  %v1700 = vpop.f32.mrb[0].mxu0
  %v1701 = vpop.f32.mrb[0].mxu0
  %1702 = vdwg.mxu0
  %v1703 = vadd.f32 %v1651, %v1698
  %v1704 = vxor.u32 %v1703, 2147483648
  %v1705 = vmul.f32 %v1704, 1.442695
  %v1706 = vpow.pop %v1705
  %v1707 = vadd.f32 %v1706, 1.0
  %v1708 = vrcp.pop %v1707
  %v1709 = vmul.f32 1.0, %v1708
  %v1710 = vtanh.pop %v1703
  %v1711 = vmul.f32 %v1709, %v1530
  %1713 = vrot.lane.b32.xlu0 %v1710, 64
  %v1714 = vpop.permute.xlu0 %1713
  %v1716 = vmul.f32 %v1709, %v1714
  %1718 = vrot.lane.b32.xlu0 %v1716, 32
  %v1719 = vpop.permute.xlu0 %1718
  %v1721 = vadd.f32 %v1711, %v1719
  %v1722 = vtanh.pop %v1721
  %1724 = vrot.lane.b32.xlu0 %v1722, 64
  %v1725 = vpop.permute.xlu0 %1724
  %v1727 = vmul.f32 %v1709, %v1725
  %v1729 = vrot.slane %v1345, 6
  %v1732 = vrot.slane %v1536, 4
  %v1735 = vrot.slane %v1727, 2
  %vm1737 = vcmask 1041408
  %v1738 = vsel %vm1737, %v1154, %v1729
  %vm1739 = vcmask 1043456
  %v1740 = vsel %vm1739, %v1738, %v1732
  %vm1741 = vcmask 1045504
  %v1742 = vsel %vm1741, %v1740, %v1735
  %v1743 = vpack.c.bf16 %v1742, %v1742
  %v1744 = vld [vmem:[%s6] sm:$0xf]
  %v1745 = vld [vmem:[%s6 + $0x4] sm:$0xf]
  %v1746 = vld [vmem:[%s6 + $0x8] sm:$0xf]
  %v1747 = vld [vmem:[%s6 + $0xc] sm:$0xf]
  %v1748 = vld [vmem:[%s7] sm:$0x1]
  %v1750 = vlaneseq
  %v1751 = vshrl.u32 %v1750, 7
  %v1752 = vsub.s32 0, %v1751
  %v1753 = vrot.slane %v1748, %v1752
  %1756 = vrot.lane.b32.xlu0 %v1743, 32
  %v1757 = vpop.permute.xlu0 %1756
  %v1762 = vunpack.c.l.b16 %v1744
  %v1763 = vunpack.c.l.b16 %v1745
  %v1764 = vunpack.c.l.b16 %v1746
  %v1765 = vunpack.c.l.b16 %v1747
  %v1766 = vpack.c.b16 %v1763, %v1762
  %v1767 = vpack.c.b16 %v1765, %v1764
  %v1771 = vsel %vm112, %v1757, 0
  %1773 = vmatprep.subr.bf16.mxu0 0
  %1774 = vmatpush1.bf16.msra.mxu0 %v1766
  %1775 = vmatprep.subr.bf16.mxu0 0
  %1776 = vmatpush1.bf16.msra.mxu0 %v1767
  %1777 = vmatprep.subr.bf16.mxu0 0
  %1778 = vmatpush1.bf16.msra.mxu0 0
  %1779 = vmatprep.subr.bf16.mxu0 0
  %1780 = vmatpush1.bf16.msra.mxu0 0
  %1781 = vmatprep.subr.bf16.mxu0 0
  %1782 = vmatpush1.bf16.msra.mxu0 0
  %1783 = vmatprep.subr.bf16.mxu0 0
  %1784 = vmatpush1.bf16.msra.mxu0 0
  %1785 = vmatprep.subr.bf16.mxu0 0
  %1786 = vmatpush1.bf16.msra.mxu0 0
  %1787 = vmatprep.subr.bf16.mxu0 0
  %1788 = vmatpush1.bf16.msra.mxu0 0
  %1789 = vmatprep.subr.bf16.mxu0 0
  %1790 = vmatpush1.bf16.msra.mxu0 0
  %1791 = vmatprep.subr.bf16.mxu0 0
  %1792 = vmatpush1.bf16.msra.mxu0 0
  %1793 = vmatprep.subr.bf16.mxu0 0
  %1794 = vmatpush1.bf16.msra.mxu0 0
  %1795 = vmatprep.subr.bf16.mxu0 0
  %1796 = vmatpush1.bf16.msra.mxu0 0
  %1797 = vmatprep.subr.bf16.mxu0 0
  %1798 = vmatpush1.bf16.msra.mxu0 0
  %1799 = vmatprep.subr.bf16.mxu0 0
  %1800 = vmatpush1.bf16.msra.mxu0 0
  %1801 = vmatprep.subr.bf16.mxu0 0
  %1802 = vmatpush1.bf16.msra.mxu0 0
  %1803 = vmatprep.subr.bf16.mxu0 0
  %1804 = vmatpush1.bf16.msra.mxu0 0
  %1805 = vmatprep.mubr.bf16.mxu0 0
  %1806 = vmatmul.mubr.bf16.gmra.mrb[0].mxu0 %v1771
  %v1807 = vpop.f32.mrb[0].mxu0
  %v1808 = vadd.f32 %v1753, %v1807
  %v1809 = vpop.f32.mrb[0].mxu0
  %v1810 = vpop.f32.mrb[0].mxu0
  %v1811 = vpop.f32.mrb[0].mxu0
  %1812 = vdwg.mxu0
  %1813 = vst [vmem:[%s8] sm:$0xff] %v1808
  // Predicated region
  $region34: #{model_forward.1} parent=0 // pred_check
    _
  $region35: #{model_forward.1} parent=0 // pred_check_branch
    %1815 = sbr.rel (0) target = $region37
  $region36: #{model_forward.1} parent=0 // pred_region
    _
  $region37: #{model_forward.1} parent=0 // pred_fallthru
    _
  // Predicated region
  $region38: #{model_forward.1} parent=0 // pred_check
    _
  $region39: #{model_forward.1} parent=0 // pred_check_branch
    %1817 = sbr.rel (0) target = $region41
  $region40: #{model_forward.1} parent=0 // pred_region
    _
  $region41: #{model_forward.1} parent=0 // pred_fallthru
    _

</llo_original>
